<compile_context>
chip_gen: v7x
topology: tpu7x:2x2x1
jax: 0.10.0
libtpu: 0.0.40
codegen_flags: <defaults>
</compile_context>

<pallas_src>
import math

import numpy as np
import jax
import jax.numpy as jnp
from jax.experimental import pallas as pl
from jax.experimental.pallas import tpu as pltpu


# -----------------------------------------------------------------------------
# Variant A: single contraction pass (K fits in one tile).  No scratch, no
# accumulator round-trip — each grid step computes a full (block_m, D) output
# tile for all three streams.
# -----------------------------------------------------------------------------
def _qkv_proj_kernel_single_k(xq_ref, xk_ref, xv_ref,     # (block_m, D) each
                              wq_ref, wk_ref, wv_ref,     # (D, D) each, (in, out)
                              bq_ref, bk_ref, bv_ref,     # (1, D) f32 each
                              oq_ref, ok_ref, ov_ref):    # (block_m, D) each
    oq_ref[...] = (jnp.dot(xq_ref[...], wq_ref[...],
                           preferred_element_type=jnp.float32)
                   + bq_ref[...]).astype(oq_ref.dtype)
    ok_ref[...] = (jnp.dot(xk_ref[...], wk_ref[...],
                           preferred_element_type=jnp.float32)
                   + bk_ref[...]).astype(ok_ref.dtype)
    ov_ref[...] = (jnp.dot(xv_ref[...], wv_ref[...],
                           preferred_element_type=jnp.float32)
                   + bv_ref[...]).astype(ov_ref.dtype)


# -----------------------------------------------------------------------------
# Variant B: K-tiled with f32 VMEM accumulators (canonical matmul pattern).
# Grid = (m_tiles, k_tiles): m over flattened rows N=B*S ("parallel"),
# k over the contraction dim d_model ("arbitrary", reduction, last axis).
# -----------------------------------------------------------------------------
def _qkv_proj_kernel_acc(xq_ref, xk_ref, xv_ref,          # (block_m, block_k)
                         wq_ref, wk_ref, wv_ref,          # (block_k, D)
                         bq_ref, bk_ref, bv_ref,          # (1, D) f32
                         oq_ref, ok_ref, ov_ref,          # (block_m, D)
                         accq_ref, acck_ref, accv_ref):   # (block_m, D) f32 scratch
    k_idx = pl.program_id(1)

    @pl.when(k_idx == 0)
    def _init():
        accq_ref[...] = jnp.zeros_like(accq_ref)
        acck_ref[...] = jnp.zeros_like(acck_ref)
        accv_ref[...] = jnp.zeros_like(accv_ref)

    accq_ref[...] += jnp.dot(xq_ref[...], wq_ref[...],
                             preferred_element_type=jnp.float32)
    acck_ref[...] += jnp.dot(xk_ref[...], wk_ref[...],
                             preferred_element_type=jnp.float32)
    accv_ref[...] += jnp.dot(xv_ref[...], wv_ref[...],
                             preferred_element_type=jnp.float32)

    @pl.when(k_idx == pl.num_programs(1) - 1)
    def _finalize():
        oq_ref[...] = (accq_ref[...] + bq_ref[...]).astype(oq_ref.dtype)
        ok_ref[...] = (acck_ref[...] + bk_ref[...]).astype(ok_ref.dtype)
        ov_ref[...] = (accv_ref[...] + bv_ref[...]).astype(ov_ref.dtype)


def qkv_projection(xq, xk, xv, wq_t, wk_t, wv_t, bq, bk, bv, *,
                   block_m=256, block_k=512, compute_dtype=jnp.bfloat16):
    """Fused tiled projection of three streams.

    xq/xk/xv : (N, D) activations (N = B*S).
    w*_t     : (D, D) weights in (in, out) layout (already transposed).
    b*       : (D,) biases.
    Returns three (N, D) arrays in the input dtype.
    """
    N, D = xq.shape
    assert D % 128 == 0, "d_model must be a multiple of 128 (pad upstream)"
    block_k = min(block_k, D)
    assert D % block_k == 0
    out_dtype = xq.dtype

    # Pad the row dim up to a multiple of block_m (zero rows are sliced off).
    n_pad = pl.cdiv(N, block_m) * block_m
    if n_pad != N:
        pad = ((0, n_pad - N), (0, 0))
        xq, xk, xv = (jnp.pad(a, pad) for a in (xq, xk, xv))

    # bf16 operands, f32 accumulation (weights are tiny and cast once).
    xq = xq.astype(compute_dtype)
    xk = xk.astype(compute_dtype)
    xv = xv.astype(compute_dtype)
    wq_t = wq_t.astype(compute_dtype)
    wk_t = wk_t.astype(compute_dtype)
    wv_t = wv_t.astype(compute_dtype)
    bq = bq.reshape(1, D).astype(jnp.float32)
    bk = bk.reshape(1, D).astype(jnp.float32)
    bv = bv.reshape(1, D).astype(jnp.float32)

    m_tiles = n_pad // block_m
    k_tiles = D // block_k
    single_k = (k_tiles == 1)

    # VMEM budget: double-buffered input/weight/output tiles (+ accumulators).
    cbytes = np.dtype(compute_dtype).itemsize
    obytes = np.dtype(out_dtype).itemsize
    est = (2 * 3 * (block_m * block_k + block_k * D) * cbytes   # x + w tiles
           + 2 * 3 * D * 4                                      # biases
           + 2 * 3 * block_m * D * obytes)                      # output tiles
    if not single_k:
        est += 3 * block_m * D * 4                              # f32 accumulators
    vmem_limit = min(64 * 1024 * 1024,
                     max(int(1.5 * est) + (4 << 20), 32 * 1024 * 1024))

    b_spec = pl.BlockSpec((1, D), (lambda m: (0, 0)) if single_k
                          else (lambda m, k: (0, 0)))
    out_shape = tuple(jax.ShapeDtypeStruct((n_pad, D), out_dtype) for _ in range(3))

    if single_k:
        # Whole-D contraction per step: no scratch, no pl.when, one grid axis.
        x_spec = pl.BlockSpec((block_m, D), lambda m: (m, 0))
        w_spec = pl.BlockSpec((D, D), lambda m: (0, 0))
        o_spec = pl.BlockSpec((block_m, D), lambda m: (m, 0))
        grid = (m_tiles,)
        kernel = _qkv_proj_kernel_single_k
        scratch_shapes = []
        dim_sem = ("parallel",)
    else:
        x_spec = pl.BlockSpec((block_m, block_k), lambda m, k: (m, k))
        w_spec = pl.BlockSpec((block_k, D), lambda m, k: (k, 0))
        o_spec = pl.BlockSpec((block_m, D), lambda m, k: (m, 0))
        grid = (m_tiles, k_tiles)
        kernel = _qkv_proj_kernel_acc
        scratch_shapes = [pltpu.VMEM((block_m, D), jnp.float32)] * 3
        dim_sem = ("parallel", "arbitrary")

    oq, ok_, ov = pl.pallas_call(
        kernel,
        out_shape=out_shape,
        grid_spec=pltpu.PrefetchScalarGridSpec(
            num_scalar_prefetch=0,
            grid=grid,
            in_specs=[x_spec, x_spec, x_spec,
                      w_spec, w_spec, w_spec,
                      b_spec, b_spec, b_spec],
            out_specs=[o_spec, o_spec, o_spec],
            scratch_shapes=scratch_shapes,
        ),
        compiler_params=pltpu.CompilerParams(
            dimension_semantics=dim_sem,
            vmem_limit_bytes=vmem_limit,
        ),
    )(xq, xk, xv, wq_t, wk_t, wv_t, bq, bk, bv)

    if n_pad != N:
        oq, ok_, ov = oq[:N], ok_[:N], ov[:N]
    return oq, ok_, ov


class MultiheadAttentionPallas:
    """JAX/Pallas port of the (partial) PyTorch MultiheadAttention forward."""

    def __init__(self, d_model: int, h: int, dropout: float, key,
                 block_m: int = 256, block_k: int = 512,
                 compute_dtype=jnp.bfloat16) -> None:
        assert d_model % h == 0
        self.d_model = d_model
        self.h = h
        self.d_k = d_model // h
        self.block_m = block_m
        self.block_k = block_k
        self.compute_dtype = compute_dtype

        # Deterministic nn.Linear-style init: U(-1/sqrt(in), 1/sqrt(in)).
        bound = 1.0 / math.sqrt(d_model)
        keys = jax.random.split(key, 8)

        def lin(kw, kb):
            w = jax.random.uniform(kw, (d_model, d_model), jnp.float32, -bound, bound)
            b = jax.random.uniform(kb, (d_model,), jnp.float32, -bound, bound)
            return w, b

        self.wq, self.bq = lin(keys[0], keys[1])
        self.wk, self.bk = lin(keys[2], keys[3])
        self.wv, self.bv = lin(keys[4], keys[5])
        # w_o exists in __init__ but is never used in the reference forward().
        self.wo, self.bo = lin(keys[6], keys[7])

        # One-time transpose to (in, out) so the kernel never does w.T.
        self.wq_t = self.wq.T
        self.wk_t = self.wk.T
        self.wv_t = self.wv.T

    def __call__(self, q, k, v, mask=None):
        B, S, D = q.shape
        assert D == self.d_model

        oq, ok_, ov = qkv_projection(
            q.reshape(B * S, D), k.reshape(B * S, D), v.reshape(B * S, D),
            self.wq_t, self.wk_t, self.wv_t,
            self.bq, self.bk, self.bv,
            block_m=self.block_m, block_k=self.block_k,
            compute_dtype=self.compute_dtype,
        )

        def to_heads(flat):
            # .view(B, S, h, d_k).transpose(1, 2) -> (B, h, S, d_k)
            # TODO(synk): this transpose is left to XLA — with d_k < 128 an
            # in-kernel transposed store would be lane-narrow (masked vst);
            # a downstream attention kernel should consume (B, S, h*d_k) directly.
            return flat.reshape(B, S, self.h, self.d_k).transpose(0, 2, 1, 3)

        # The reference forward() stops here (no attention, no w_o, no return).
        return to_heads(oq), to_heads(ok_), to_heads(ov)


def _reference_jax(mha: MultiheadAttentionPallas, q, k, v):
    """Pure-JAX f32 reference of the same computation for correctness checking."""
    B, S, D = q.shape

    def proj(x, w, b):
        return x @ w.T + b

    def to_heads(y):
        return y.reshape(B, S, mha.h, mha.d_k).transpose(0, 2, 1, 3)

    return (
        to_heads(proj(q, mha.wq, mha.bq)),
        to_heads(proj(k, mha.wk, mha.bk)),
        to_heads(proj(v, mha.wv, mha.bv)),
    )


if __name__ == "__main__":
    # 128-aligned small shapes (lane-dense tiles; avoids masked partial stores).
    B, S, d_model, h = 2, 128, 256, 8   # N = B*S = 256, d_k = 32

    root = jax.random.PRNGKey(0)
    k_params, k_q, k_k, k_v = jax.random.split(root, 4)

    q = jax.random.normal(k_q, (B, S, d_model), jnp.float32)
    k = jax.random.normal(k_k, (B, S, d_model), jnp.float32)
    v = jax.random.normal(k_v, (B, S, d_model), jnp.float32)

    # --- Path 1: K-tiled accumulator kernel (block_k < d_model => grid (2, 2)).
    mha_acc = MultiheadAttentionPallas(d_model=d_model, h=h, dropout=0.1,
                                       key=k_params, block_m=128, block_k=128,
                                       compute_dtype=jnp.bfloat16)
    q_heads, k_heads, v_heads = mha_acc(q, k, v, mask=None)
    jax.block_until_ready((q_heads, k_heads, v_heads))

    # --- Path 2: single-K-pass kernel (block_k >= d_model => no scratch).
    mha_1k = MultiheadAttentionPallas(d_model=d_model, h=h, dropout=0.1,
                                      key=k_params, block_m=128, block_k=512,
                                      compute_dtype=jnp.bfloat16)
    q1, k1, v1 = mha_1k(q, k, v, mask=None)
    jax.block_until_ready((q1, k1, v1))

    # Sanity-check against pure-JAX f32 reference (bf16 operands => loose tol).
    rq, rk, rv = _reference_jax(mha_acc, q, k, v)
    assert q_heads.shape == (B, h, S, d_model // h)
    assert k_heads.shape == (B, h, S, d_model // h)
    assert v_heads.shape == (B, h, S, d_model // h)
    for got, ref in ((q_heads, rq), (k_heads, rk), (v_heads, rv),
                     (q1, rq), (k1, rk), (v1, rv)):
        assert jnp.allclose(got, ref, atol=2e-2, rtol=2e-2)

    print("KERNEL_OK")
</pallas_src>

<mosaic_0001>
module attributes {stable_mosaic.version = 11 : i64} {
  func.func @_qkv_proj_kernel_acc(%arg0: i32, %arg1: i32, %arg2: memref<128x128xbf16, #tpu.memory_space<vmem>>, %arg3: memref<128x128xbf16, #tpu.memory_space<vmem>>, %arg4: memref<128x128xbf16, #tpu.memory_space<vmem>>, %arg5: memref<128x256xbf16, #tpu.memory_space<vmem>>, %arg6: memref<128x256xbf16, #tpu.memory_space<vmem>>, %arg7: memref<128x256xbf16, #tpu.memory_space<vmem>>, %arg8: memref<1x256xf32, #tpu.memory_space<vmem>>, %arg9: memref<1x256xf32, #tpu.memory_space<vmem>>, %arg10: memref<1x256xf32, #tpu.memory_space<vmem>>, %arg11: memref<128x256xf32, #tpu.memory_space<vmem>>, %arg12: memref<128x256xf32, #tpu.memory_space<vmem>>, %arg13: memref<128x256xf32, #tpu.memory_space<vmem>>, %arg14: memref<128x256xf32, #tpu.memory_space<vmem>>, %arg15: memref<128x256xf32, #tpu.memory_space<vmem>>, %arg16: memref<128x256xf32, #tpu.memory_space<vmem>>) attributes {dimension_semantics = [#tpu.dimension_semantics<parallel>, #tpu.dimension_semantics<arbitrary>], iteration_bounds = array<i64: 2, 2>, scalar_prefetch = 0 : i64, scratch_operands = 3 : i64, tpu.core_type = #tpu.core_type<tc>, window_params = [{transform_indices = @transform_0, window_bounds = array<i64: 128, 128>}, {transform_indices = @transform_1, window_bounds = array<i64: 128, 128>}, {transform_indices = @transform_2, window_bounds = array<i64: 128, 128>}, {transform_indices = @transform_3, window_bounds = array<i64: 128, 256>}, {transform_indices = @transform_4, window_bounds = array<i64: 128, 256>}, {transform_indices = @transform_5, window_bounds = array<i64: 128, 256>}, {pipeline_mode = #tpu.pipeline_mode<synchronous>, transform_indices = @transform_6, window_bounds = array<i64: 1, 256>}, {pipeline_mode = #tpu.pipeline_mode<synchronous>, transform_indices = @transform_7, window_bounds = array<i64: 1, 256>}, {pipeline_mode = #tpu.pipeline_mode<synchronous>, transform_indices = @transform_8, window_bounds = array<i64: 1, 256>}, {transform_indices = @transform_9, window_bounds = array<i64: 128, 256>}, {transform_indices = @transform_10, window_bounds = array<i64: 128, 256>}, {transform_indices = @transform_11, window_bounds = array<i64: 128, 256>}]} {
    %c0_i32 = arith.constant 0 : i32
    %0 = arith.cmpi eq, %arg1, %c0_i32 : i32
    %1 = arith.extui %0 : i1 to i32
    %c0_i32_0 = arith.constant 0 : i32
    %2 = arith.cmpi ne, %1, %c0_i32_0 : i32
    scf.if %2 {
      %cst_27 = arith.constant 0.000000e+00 : f32
      %24 = vector.broadcast %cst_27 : f32 to vector<128x256xf32>
      %c0_28 = arith.constant 0 : index
      %c0_29 = arith.constant 0 : index
      %25 = vector.load %arg14[%c0_28, %c0_29] : memref<128x256xf32, #tpu.memory_space<vmem>>, vector<128x256xf32>
      tpu.vector_store %arg14[%c0_28, %c0_29], %24 {strides = array<i32>} : memref<128x256xf32, #tpu.memory_space<vmem>>, vector<128x256xf32>,
      %cst_30 = arith.constant 0.000000e+00 : f32
      %26 = vector.broadcast %cst_30 : f32 to vector<128x256xf32>
      %c0_31 = arith.constant 0 : index
      %c0_32 = arith.constant 0 : index
      %27 = vector.load %arg15[%c0_31, %c0_32] : memref<128x256xf32, #tpu.memory_space<vmem>>, vector<128x256xf32>
      tpu.vector_store %arg15[%c0_31, %c0_32], %26 {strides = array<i32>} : memref<128x256xf32, #tpu.memory_space<vmem>>, vector<128x256xf32>,
      %cst_33 = arith.constant 0.000000e+00 : f32
      %28 = vector.broadcast %cst_33 : f32 to vector<128x256xf32>
      %c0_34 = arith.constant 0 : index
      %c0_35 = arith.constant 0 : index
      %29 = vector.load %arg16[%c0_34, %c0_35] : memref<128x256xf32, #tpu.memory_space<vmem>>, vector<128x256xf32>
      tpu.vector_store %arg16[%c0_34, %c0_35], %28 {strides = array<i32>} : memref<128x256xf32, #tpu.memory_space<vmem>>, vector<128x256xf32>,
    } else {
    }
    %c0 = arith.constant 0 : index
    %c0_1 = arith.constant 0 : index
    %3 = vector.load %arg14[%c0, %c0_1] : memref<128x256xf32, #tpu.memory_space<vmem>>, vector<128x256xf32>
    %c0_2 = arith.constant 0 : index
    %c0_3 = arith.constant 0 : index
    %4 = vector.load %arg2[%c0_2, %c0_3] : memref<128x128xbf16, #tpu.memory_space<vmem>>, vector<128x128xbf16>
    %c0_4 = arith.constant 0 : index
    %c0_5 = arith.constant 0 : index
    %5 = vector.load %arg5[%c0_4, %c0_5] : memref<128x256xbf16, #tpu.memory_space<vmem>>, vector<128x256xbf16>
    %cst = arith.constant dense<0.000000e+00> : vector<128x256xf32>
    %6 = tpu.matmul %4, %5, %cst {dimension_numbers = #tpu.dot_dimension_numbers<[1], [0], [0], [1], [0, 0, 1, 1], [], []>} : vector<128x128xbf16>, vector<128x256xbf16>, vector<128x256xf32> -> vector<128x256xf32>
    %7 = arith.addf %3, %6 : vector<128x256xf32>
    %c0_6 = arith.constant 0 : index
    %c0_7 = arith.constant 0 : index
    %8 = vector.load %arg14[%c0_6, %c0_7] : memref<128x256xf32, #tpu.memory_space<vmem>>, vector<128x256xf32>
    tpu.vector_store %arg14[%c0_6, %c0_7], %7 {strides = array<i32>} : memref<128x256xf32, #tpu.memory_space<vmem>>, vector<128x256xf32>,
    %c0_8 = arith.constant 0 : index
    %c0_9 = arith.constant 0 : index
    %9 = vector.load %arg15[%c0_8, %c0_9] : memref<128x256xf32, #tpu.memory_space<vmem>>, vector<128x256xf32>
    %c0_10 = arith.constant 0 : index
    %c0_11 = arith.constant 0 : index
    %10 = vector.load %arg3[%c0_10, %c0_11] : memref<128x128xbf16, #tpu.memory_space<vmem>>, vector<128x128xbf16>
    %c0_12 = arith.constant 0 : index
    %c0_13 = arith.constant 0 : index
    %11 = vector.load %arg6[%c0_12, %c0_13] : memref<128x256xbf16, #tpu.memory_space<vmem>>, vector<128x256xbf16>
    %cst_14 = arith.constant dense<0.000000e+00> : vector<128x256xf32>
    %12 = tpu.matmul %10, %11, %cst_14 {dimension_numbers = #tpu.dot_dimension_numbers<[1], [0], [0], [1], [0, 0, 1, 1], [], []>} : vector<128x128xbf16>, vector<128x256xbf16>, vector<128x256xf32> -> vector<128x256xf32>
    %13 = arith.addf %9, %12 : vector<128x256xf32>
    %c0_15 = arith.constant 0 : index
    %c0_16 = arith.constant 0 : index
    %14 = vector.load %arg15[%c0_15, %c0_16] : memref<128x256xf32, #tpu.memory_space<vmem>>, vector<128x256xf32>
    tpu.vector_store %arg15[%c0_15, %c0_16], %13 {strides = array<i32>} : memref<128x256xf32, #tpu.memory_space<vmem>>, vector<128x256xf32>,
    %c0_17 = arith.constant 0 : index
    %c0_18 = arith.constant 0 : index
    %15 = vector.load %arg16[%c0_17, %c0_18] : memref<128x256xf32, #tpu.memory_space<vmem>>, vector<128x256xf32>
    %c0_19 = arith.constant 0 : index
    %c0_20 = arith.constant 0 : index
    %16 = vector.load %arg4[%c0_19, %c0_20] : memref<128x128xbf16, #tpu.memory_space<vmem>>, vector<128x128xbf16>
    %c0_21 = arith.constant 0 : index
    %c0_22 = arith.constant 0 : index
    %17 = vector.load %arg7[%c0_21, %c0_22] : memref<128x256xbf16, #tpu.memory_space<vmem>>, vector<128x256xbf16>
    %cst_23 = arith.constant dense<0.000000e+00> : vector<128x256xf32>
    %18 = tpu.matmul %16, %17, %cst_23 {dimension_numbers = #tpu.dot_dimension_numbers<[1], [0], [0], [1], [0, 0, 1, 1], [], []>} : vector<128x128xbf16>, vector<128x256xbf16>, vector<128x256xf32> -> vector<128x256xf32>
    %19 = arith.addf %15, %18 : vector<128x256xf32>
    %c0_24 = arith.constant 0 : index
    %c0_25 = arith.constant 0 : index
    %20 = vector.load %arg16[%c0_24, %c0_25] : memref<128x256xf32, #tpu.memory_space<vmem>>, vector<128x256xf32>
    tpu.vector_store %arg16[%c0_24, %c0_25], %19 {strides = array<i32>} : memref<128x256xf32, #tpu.memory_space<vmem>>, vector<128x256xf32>,
    %c1_i32 = arith.constant 1 : i32
    %21 = arith.cmpi eq, %arg1, %c1_i32 : i32
    %22 = arith.extui %21 : i1 to i32
    %c0_i32_26 = arith.constant 0 : i32
    %23 = arith.cmpi ne, %22, %c0_i32_26 : i32
    scf.if %23 {
      %c0_27 = arith.constant 0 : index
      %c0_28 = arith.constant 0 : index
      %24 = vector.load %arg14[%c0_27, %c0_28] : memref<128x256xf32, #tpu.memory_space<vmem>>, vector<128x256xf32>
      %c0_29 = arith.constant 0 : index
      %c0_30 = arith.constant 0 : index
      %25 = vector.load %arg8[%c0_29, %c0_30] : memref<1x256xf32, #tpu.memory_space<vmem>>, vector<1x256xf32>
      %26 = vector.broadcast %25 : vector<1x256xf32> to vector<128x256xf32>
      %27 = arith.addf %24, %26 : vector<128x256xf32>
      %c0_31 = arith.constant 0 : index
      %c0_32 = arith.constant 0 : index
      %28 = vector.load %arg11[%c0_31, %c0_32] : memref<128x256xf32, #tpu.memory_space<vmem>>, vector<128x256xf32>
      tpu.vector_store %arg11[%c0_31, %c0_32], %27 {strides = array<i32>} : memref<128x256xf32, #tpu.memory_space<vmem>>, vector<128x256xf32>,
      %c0_33 = arith.constant 0 : index
      %c0_34 = arith.constant 0 : index
      %29 = vector.load %arg15[%c0_33, %c0_34] : memref<128x256xf32, #tpu.memory_space<vmem>>, vector<128x256xf32>
      %c0_35 = arith.constant 0 : index
      %c0_36 = arith.constant 0 : index
      %30 = vector.load %arg9[%c0_35, %c0_36] : memref<1x256xf32, #tpu.memory_space<vmem>>, vector<1x256xf32>
      %31 = vector.broadcast %30 : vector<1x256xf32> to vector<128x256xf32>
      %32 = arith.addf %29, %31 : vector<128x256xf32>
      %c0_37 = arith.constant 0 : index
      %c0_38 = arith.constant 0 : index
      %33 = vector.load %arg12[%c0_37, %c0_38] : memref<128x256xf32, #tpu.memory_space<vmem>>, vector<128x256xf32>
      tpu.vector_store %arg12[%c0_37, %c0_38], %32 {strides = array<i32>} : memref<128x256xf32, #tpu.memory_space<vmem>>, vector<128x256xf32>,
      %c0_39 = arith.constant 0 : index
      %c0_40 = arith.constant 0 : index
      %34 = vector.load %arg16[%c0_39, %c0_40] : memref<128x256xf32, #tpu.memory_space<vmem>>, vector<128x256xf32>
      %c0_41 = arith.constant 0 : index
      %c0_42 = arith.constant 0 : index
      %35 = vector.load %arg10[%c0_41, %c0_42] : memref<1x256xf32, #tpu.memory_space<vmem>>, vector<1x256xf32>
      %36 = vector.broadcast %35 : vector<1x256xf32> to vector<128x256xf32>
      %37 = arith.addf %34, %36 : vector<128x256xf32>
      %c0_43 = arith.constant 0 : index
      %c0_44 = arith.constant 0 : index
      %38 = vector.load %arg13[%c0_43, %c0_44] : memref<128x256xf32, #tpu.memory_space<vmem>>, vector<128x256xf32>
      tpu.vector_store %arg13[%c0_43, %c0_44], %37 {strides = array<i32>} : memref<128x256xf32, #tpu.memory_space<vmem>>, vector<128x256xf32>,
    } else {
    }
    return
  }
  func.func @transform_0(%arg0: i32, %arg1: i32) -> (i32, i32) {
    %c0_i32 = arith.constant 0 : i32
    return %arg0, %arg1 : i32, i32
  }
  func.func @transform_1(%arg0: i32, %arg1: i32) -> (i32, i32) {
    %c0_i32 = arith.constant 0 : i32
    return %arg0, %arg1 : i32, i32
  }
  func.func @transform_2(%arg0: i32, %arg1: i32) -> (i32, i32) {
    %c0_i32 = arith.constant 0 : i32
    return %arg0, %arg1 : i32, i32
  }
  func.func @transform_3(%arg0: i32, %arg1: i32) -> (i32, i32) {
    %c0_i32 = arith.constant 0 : i32
    %c0_i32_0 = arith.constant 0 : i32
    return %arg1, %c0_i32 : i32, i32
  }
  func.func @transform_4(%arg0: i32, %arg1: i32) -> (i32, i32) {
    %c0_i32 = arith.constant 0 : i32
    %c0_i32_0 = arith.constant 0 : i32
    return %arg1, %c0_i32 : i32, i32
  }
  func.func @transform_5(%arg0: i32, %arg1: i32) -> (i32, i32) {
    %c0_i32 = arith.constant 0 : i32
    %c0_i32_0 = arith.constant 0 : i32
    return %arg1, %c0_i32 : i32, i32
  }
  func.func @transform_6(%arg0: i32, %arg1: i32) -> (i32, i32) {
    %c0_i32 = arith.constant 0 : i32
    %c0_i32_0 = arith.constant 0 : i32
    %c0_i32_1 = arith.constant 0 : i32
    return %c0_i32, %c0_i32_0 : i32, i32
  }
  func.func @transform_7(%arg0: i32, %arg1: i32) -> (i32, i32) {
    %c0_i32 = arith.constant 0 : i32
    %c0_i32_0 = arith.constant 0 : i32
    %c0_i32_1 = arith.constant 0 : i32
    return %c0_i32, %c0_i32_0 : i32, i32
  }
  func.func @transform_8(%arg0: i32, %arg1: i32) -> (i32, i32) {
    %c0_i32 = arith.constant 0 : i32
    %c0_i32_0 = arith.constant 0 : i32
    %c0_i32_1 = arith.constant 0 : i32
    return %c0_i32, %c0_i32_0 : i32, i32
  }
  func.func @transform_9(%arg0: i32, %arg1: i32) -> (i32, i32) {
    %c0_i32 = arith.constant 0 : i32
    %c0_i32_0 = arith.constant 0 : i32
    return %arg0, %c0_i32 : i32, i32
  }
  func.func @transform_10(%arg0: i32, %arg1: i32) -> (i32, i32) {
    %c0_i32 = arith.constant 0 : i32
    %c0_i32_0 = arith.constant 0 : i32
    return %arg0, %c0_i32 : i32, i32
  }
  func.func @transform_11(%arg0: i32, %arg1: i32) -> (i32, i32) {
    %c0_i32 = arith.constant 0 : i32
    %c0_i32_0 = arith.constant 0 : i32
    return %arg0, %c0_i32 : i32, i32
  }
}

</mosaic_0001>

<llo_original>
// kernel: tpu_custom_call.1
$region0: #{tpu_custom_call.1}
  #allocation0 [shape = 'u32[]', space=smem, size = 0x4, offset = 0x4, fixed_abs, tag = 'smem constant byte address 0x4 - core index']
  #allocation1 [shape = 'u32[144,128]{1,0:T(1,128)}', space=vmem, size = 0x12000, scoped, tag = 'internal scratch']
  #allocation2 [shape = 'f32[128,256]{1,0:T(8,128)}', space=vmem, size = 0x20000, scoped, tag = 'scratch operand']
  #allocation3 [shape = 'f32[128,256]{1,0:T(8,128)}', space=vmem, size = 0x20000, scoped, tag = 'scratch operand']
  #allocation4 [shape = 'f32[128,256]{1,0:T(8,128)}', space=vmem, size = 0x20000, scoped, tag = 'scratch operand']
  %s0 = inlined_call_operand.hbm [shape: bf16[256,256], index: 0, kind: input, shape index: {}]
  %s1 = inlined_call_operand.hbm [shape: bf16[256,256], index: 1, kind: input, shape index: {}]
  %s2 = inlined_call_operand.hbm [shape: bf16[256,256], index: 2, kind: input, shape index: {}]
  %s3 = inlined_call_operand.hbm [shape: bf16[256,256], index: 3, kind: input, shape index: {}]
  %s4 = inlined_call_operand.hbm [shape: bf16[256,256], index: 4, kind: input, shape index: {}]
  %s5 = inlined_call_operand.hbm [shape: bf16[256,256], index: 5, kind: input, shape index: {}]
  %s6 = inlined_call_operand.vmem [shape: f32[1,256], index: 6, kind: input, shape index: {}]
  %s7 = inlined_call_operand.vmem [shape: f32[1,256], index: 7, kind: input, shape index: {}]
  %s8 = inlined_call_operand.vmem [shape: f32[1,256], index: 8, kind: input, shape index: {}]
  %s9 = inlined_call_operand.hbm [shape: f32[256,256], index: 9, kind: output, shape index: {0}]
  %s10 = inlined_call_operand.hbm [shape: f32[256,256], index: 10, kind: output, shape index: {1}]
  %s11 = inlined_call_operand.hbm [shape: f32[256,256], index: 11, kind: output, shape index: {2}]
  %12 = xla_tuple %s9, %s10, %s11
  %s13 = sld [smem:[#allocation0]]
  $region117: #{tpu_custom_call.1} parent=0
    _
  %s15 = ssub.s32 1, %s13
  %s16 = scalar_select 0, %s15, %s13
  $region1: #{tpu_custom_call.1} parent=0
    #allocation5 [shape = 'u8[65536]{0}', space=vmem, size = 0x10000, scoped, tag = 'input window, operand 0']
    #allocation6 [shape = 's32[2]{0}', space=sflag, size = 0x8, scoped, tag = 'scoped memory for tpu_custom_call.1']
    #allocation7 [shape = 's32[2]{0}', space=sflag, size = 0x8, scoped, tag = 'scoped memory for tpu_custom_call.1']
    #allocation8 [shape = 'u8[65536]{0}', space=vmem, size = 0x10000, scoped, tag = 'input window, operand 1']
    #allocation9 [shape = 's32[2]{0}', space=sflag, size = 0x8, scoped, tag = 'scoped memory for tpu_custom_call.1']
    #allocation10 [shape = 'u8[65536]{0}', space=vmem, size = 0x10000, scoped, tag = 'input window, operand 2']
    #allocation11 [shape = 'u8[131072]{0}', space=vmem, size = 0x20000, scoped, tag = 'input window, operand 3']
    #allocation12 [shape = 's32[2]{0}', space=sflag, size = 0x8, scoped, tag = 'scoped memory for tpu_custom_call.1']
    #allocation13 [shape = 'u8[131072]{0}', space=vmem, size = 0x20000, scoped, tag = 'input window, operand 4']
    #allocation14 [shape = 'u8[131072]{0}', space=vmem, size = 0x20000, scoped, tag = 'input window, operand 5']
    #allocation15 [shape = 's32[2]{0}', space=sflag, size = 0x8, scoped, tag = 'scoped memory for tpu_custom_call.1']
    #allocation16 [shape = 'u8[262144]{0}', space=vmem, size = 0x40000, scoped, tag = 'output window, operand 0']
    #allocation17 [shape = 'u8[262144]{0}', space=vmem, size = 0x40000, scoped, tag = 'output window, operand 1']
    #allocation18 [shape = 's32[2]{0}', space=sflag, size = 0x8, scoped, tag = 'scoped memory for tpu_custom_call.1']
    #allocation19 [shape = 'u8[262144]{0}', space=vmem, size = 0x40000, scoped, tag = 'output window, operand 2']
    %17 = vsyncpa [#allocation6], 0
    %s18 = scalar_lea.sflag [#allocation6], 1
    %19 = vsyncpa %s18, 0
    %20 = vsyncpa [#allocation9], 0
    %s21 = scalar_lea.sflag [#allocation9], 1
    %22 = vsyncpa %s21, 0
    %23 = vsyncpa [#allocation12], 0
    %s24 = scalar_lea.sflag [#allocation12], 1
    %25 = vsyncpa %s24, 0
    %26 = vsyncpa [#allocation15], 0
    %s27 = scalar_lea.sflag [#allocation15], 1
    %28 = vsyncpa %s27, 0
    %29 = vsyncpa [#allocation7], 0
    %s30 = scalar_lea.sflag [#allocation7], 1
    %31 = vsyncpa %s30, 0
    %32 = vsyncpa [#allocation18], 0
    %s33 = scalar_lea.sflag [#allocation18], 1
    %34 = vsyncpa %s33, 0
    loop: start=0, step=1, limit=6
    $region2: #{tpu_custom_call.1} parent=1 // loop_pre_header
      _
    $region3: #{tpu_custom_call.1} parent=1 // loop_header
      %s36 = sphi 0, %s40
      %p37 = scmp.ge.s32.totalorder %s36, 6
      %s43 = sphi 0, %s55
      %s44 = sphi 0, %s51
      %s45 = sphi 0, %s43
      %s46 = sphi 0, %s44
      %s47 = sphi 0, %s45
      %s48 = sphi 0, %s46
      %s60 = sphi 0, %s62
      %s63 = sphi 0, %s60
      %s64 = sphi 0, %s63
      %s80 = sphi 0, %s64
      %s88 = sphi 0, %s90
      %s91 = sphi 0, %s88
      %s92 = sphi 0, %s91
      %s108 = sphi 0, %s92
      %s116 = sphi 0, %s118
      %s119 = sphi 0, %s116
      %s120 = sphi 0, %s119
      %s136 = sphi 0, %s120
      %s142 = sphi 0, %s144
      %s145 = sphi 0, %s142
      %s146 = sphi 0, %s145
      %s162 = sphi 0, %s146
      %s168 = sphi 0, %s170
      %s171 = sphi 0, %s168
      %s172 = sphi 0, %s171
      %s188 = sphi 0, %s172
      %s194 = sphi 0, %s196
      %s197 = sphi 0, %s194
      %s198 = sphi 0, %s197
      %s214 = sphi 0, %s198
      %s218 = sphi 0, %s218
      %s220 = sphi 0, %s218
      %s221 = sphi 0, %s220
      %s235 = sphi 0, %s221
      %s239 = sphi 0, %s239
      %s241 = sphi 0, %s239
      %s242 = sphi 0, %s241
      %s256 = sphi 0, %s242
      %s260 = sphi 0, %s260
      %s262 = sphi 0, %s260
      %s263 = sphi 0, %s262
      %s277 = sphi 0, %s263
      %s283 = sphi 0, %s285
      %s286 = sphi 0, %s283
      %s287 = sphi 0, %s286
      %s303 = sphi 0, %s287
      %s309 = sphi 0, %s311
      %s312 = sphi 0, %s309
      %s313 = sphi 0, %s312
      %s329 = sphi 0, %s313
      %s335 = sphi 0, %s337
      %s338 = sphi 0, %s335
      %s339 = sphi 0, %s338
      %s355 = sphi 0, %s339
    $region4: #{tpu_custom_call.1} parent=1 // loop_header_branch
      %39 = sbr.rel (%p37) target = $region8
    $region5: #{tpu_custom_call.1} parent=1 // loop_body
      %s41 = ssub.s32 %s36, 1
      %s42 = ssub.s32 %s36, 2
      %s49 = sadd.s32 1, %s44
      %p50 = scmp.ge.s32.totalorder %s49, 2
      %s51 = scalar_select %p50, 0, %s49
      %s52 = sadd.s32 1, %s43
      %s53 = scalar_select %p50, %s52, %s43
      %p54 = scmp.ge.s32.totalorder %s53, 2
      %s55 = scalar_select %p54, 0, %s53
      %s56 = ssub.s32 %s43, %s55
      %s57 = ssub.s32 %s44, %s51
      %s58 = sor.u32 %s56, %s57
      %p59 = scmp.eq.s32.totalorder %s58, 0
      %s61 = sadd.s32 %s60, 1
      %s62 = scalar_select %p59, %s60, %s61
      %p65 = pneg %p59
      %p66 = scmp.eq.s32.totalorder %s36, 3
      %p67 = por %p65, %p66
      %p68 = scmp.ne.s32.totalorder %s60, %s63
      %p69 = scmp.eq.s32.totalorder %s36, 0
      %p70 = por %p68, %p69
      %p71 = scmp.ne.s32.totalorder %s60, %s63
      %p72 = scmp.eq.s32.totalorder %s41, 3
      %p73 = por %p71, %p72
      %p74 = scmp.ne.s32.totalorder %s63, %s64
      %p75 = scmp.eq.s32.totalorder %s41, 0
      %p76 = por %p74, %p75
      %p77 = scmp.ne.s32.totalorder %s63, %s64
      %p78 = scmp.eq.s32.totalorder %s42, 3
      %p79 = por %p77, %p78
      %p81 = scmp.ne.s32.totalorder %s64, %s80
      %p82 = scmp.eq.s32.totalorder %s42, 0
      %p83 = por %p81, %p82
      %s84 = ssub.s32 %s43, %s55
      %s85 = ssub.s32 %s44, %s51
      %s86 = sor.u32 %s84, %s85
      %p87 = scmp.eq.s32.totalorder %s86, 0
      %s89 = sadd.s32 %s88, 1
      %s90 = scalar_select %p87, %s88, %s89
      %p93 = pneg %p87
      %p94 = scmp.eq.s32.totalorder %s36, 3
      %p95 = por %p93, %p94
      %p96 = scmp.ne.s32.totalorder %s88, %s91
      %p97 = scmp.eq.s32.totalorder %s36, 0
      %p98 = por %p96, %p97
      %p99 = scmp.ne.s32.totalorder %s88, %s91
      %p100 = scmp.eq.s32.totalorder %s41, 3
      %p101 = por %p99, %p100
      %p102 = scmp.ne.s32.totalorder %s91, %s92
      %p103 = scmp.eq.s32.totalorder %s41, 0
      %p104 = por %p102, %p103
      %p105 = scmp.ne.s32.totalorder %s91, %s92
      %p106 = scmp.eq.s32.totalorder %s42, 3
      %p107 = por %p105, %p106
      %p109 = scmp.ne.s32.totalorder %s92, %s108
      %p110 = scmp.eq.s32.totalorder %s42, 0
      %p111 = por %p109, %p110
      %s112 = ssub.s32 %s43, %s55
      %s113 = ssub.s32 %s44, %s51
      %s114 = sor.u32 %s112, %s113
      %p115 = scmp.eq.s32.totalorder %s114, 0
      %s117 = sadd.s32 %s116, 1
      %s118 = scalar_select %p115, %s116, %s117
      %p121 = pneg %p115
      %p122 = scmp.eq.s32.totalorder %s36, 3
      %p123 = por %p121, %p122
      %p124 = scmp.ne.s32.totalorder %s116, %s119
      %p125 = scmp.eq.s32.totalorder %s36, 0
      %p126 = por %p124, %p125
      %p127 = scmp.ne.s32.totalorder %s116, %s119
      %p128 = scmp.eq.s32.totalorder %s41, 3
      %p129 = por %p127, %p128
      %p130 = scmp.ne.s32.totalorder %s119, %s120
      %p131 = scmp.eq.s32.totalorder %s41, 0
      %p132 = por %p130, %p131
      %p133 = scmp.ne.s32.totalorder %s119, %s120
      %p134 = scmp.eq.s32.totalorder %s42, 3
      %p135 = por %p133, %p134
      %p137 = scmp.ne.s32.totalorder %s120, %s136
      %p138 = scmp.eq.s32.totalorder %s42, 0
      %p139 = por %p137, %p138
      %s140 = ssub.s32 %s44, %s51
      %p141 = scmp.eq.s32.totalorder %s140, 0
      %s143 = sadd.s32 %s142, 1
      %s144 = scalar_select %p141, %s142, %s143
      %p147 = pneg %p141
      %p148 = scmp.eq.s32.totalorder %s36, 3
      %p149 = por %p147, %p148
      %p150 = scmp.ne.s32.totalorder %s142, %s145
      %p151 = scmp.eq.s32.totalorder %s36, 0
      %p152 = por %p150, %p151
      %p153 = scmp.ne.s32.totalorder %s142, %s145
      %p154 = scmp.eq.s32.totalorder %s41, 3
      %p155 = por %p153, %p154
      %p156 = scmp.ne.s32.totalorder %s145, %s146
      %p157 = scmp.eq.s32.totalorder %s41, 0
      %p158 = por %p156, %p157
      %p159 = scmp.ne.s32.totalorder %s145, %s146
      %p160 = scmp.eq.s32.totalorder %s42, 3
      %p161 = por %p159, %p160
      %p163 = scmp.ne.s32.totalorder %s146, %s162
      %p164 = scmp.eq.s32.totalorder %s42, 0
      %p165 = por %p163, %p164
      %s166 = ssub.s32 %s44, %s51
      %p167 = scmp.eq.s32.totalorder %s166, 0
      %s169 = sadd.s32 %s168, 1
      %s170 = scalar_select %p167, %s168, %s169
      %p173 = pneg %p167
      %p174 = scmp.eq.s32.totalorder %s36, 3
      %p175 = por %p173, %p174
      %p176 = scmp.ne.s32.totalorder %s168, %s171
      %p177 = scmp.eq.s32.totalorder %s36, 0
      %p178 = por %p176, %p177
      %p179 = scmp.ne.s32.totalorder %s168, %s171
      %p180 = scmp.eq.s32.totalorder %s41, 3
      %p181 = por %p179, %p180
      %p182 = scmp.ne.s32.totalorder %s171, %s172
      %p183 = scmp.eq.s32.totalorder %s41, 0
      %p184 = por %p182, %p183
      %p185 = scmp.ne.s32.totalorder %s171, %s172
      %p186 = scmp.eq.s32.totalorder %s42, 3
      %p187 = por %p185, %p186
      %p189 = scmp.ne.s32.totalorder %s172, %s188
      %p190 = scmp.eq.s32.totalorder %s42, 0
      %p191 = por %p189, %p190
      %s192 = ssub.s32 %s44, %s51
      %p193 = scmp.eq.s32.totalorder %s192, 0
      %s195 = sadd.s32 %s194, 1
      %s196 = scalar_select %p193, %s194, %s195
      %p199 = pneg %p193
      %p200 = scmp.eq.s32.totalorder %s36, 3
      %p201 = por %p199, %p200
      %p202 = scmp.ne.s32.totalorder %s194, %s197
      %p203 = scmp.eq.s32.totalorder %s36, 0
      %p204 = por %p202, %p203
      %p205 = scmp.ne.s32.totalorder %s194, %s197
      %p206 = scmp.eq.s32.totalorder %s41, 3
      %p207 = por %p205, %p206
      %p208 = scmp.ne.s32.totalorder %s197, %s198
      %p209 = scmp.eq.s32.totalorder %s41, 0
      %p210 = por %p208, %p209
      %p211 = scmp.ne.s32.totalorder %s197, %s198
      %p212 = scmp.eq.s32.totalorder %s42, 3
      %p213 = por %p211, %p212
      %p215 = scmp.ne.s32.totalorder %s198, %s214
      %p216 = scmp.eq.s32.totalorder %s42, 0
      %p217 = por %p215, %p216
      %s219 = sadd.s32 %s218, 1
      %p222 = scmp.eq.s32.totalorder %s36, 3
      %p223 = scmp.ne.s32.totalorder %s218, %s220
      %p224 = scmp.eq.s32.totalorder %s36, 0
      %p225 = por %p223, %p224
      %p226 = scmp.ne.s32.totalorder %s218, %s220
      %p227 = scmp.eq.s32.totalorder %s41, 3
      %p228 = por %p226, %p227
      %p229 = scmp.ne.s32.totalorder %s220, %s221
      %p230 = scmp.eq.s32.totalorder %s41, 0
      %p231 = por %p229, %p230
      %p232 = scmp.ne.s32.totalorder %s220, %s221
      %p233 = scmp.eq.s32.totalorder %s42, 3
      %p234 = por %p232, %p233
      %p236 = scmp.ne.s32.totalorder %s221, %s235
      %p237 = scmp.eq.s32.totalorder %s42, 0
      %p238 = por %p236, %p237
      %s240 = sadd.s32 %s239, 1
      %p243 = scmp.eq.s32.totalorder %s36, 3
      %p244 = scmp.ne.s32.totalorder %s239, %s241
      %p245 = scmp.eq.s32.totalorder %s36, 0
      %p246 = por %p244, %p245
      %p247 = scmp.ne.s32.totalorder %s239, %s241
      %p248 = scmp.eq.s32.totalorder %s41, 3
      %p249 = por %p247, %p248
      %p250 = scmp.ne.s32.totalorder %s241, %s242
      %p251 = scmp.eq.s32.totalorder %s41, 0
      %p252 = por %p250, %p251
      %p253 = scmp.ne.s32.totalorder %s241, %s242
      %p254 = scmp.eq.s32.totalorder %s42, 3
      %p255 = por %p253, %p254
      %p257 = scmp.ne.s32.totalorder %s242, %s256
      %p258 = scmp.eq.s32.totalorder %s42, 0
      %p259 = por %p257, %p258
      %s261 = sadd.s32 %s260, 1
      %p264 = scmp.eq.s32.totalorder %s36, 3
      %p265 = scmp.ne.s32.totalorder %s260, %s262
      %p266 = scmp.eq.s32.totalorder %s36, 0
      %p267 = por %p265, %p266
      %p268 = scmp.ne.s32.totalorder %s260, %s262
      %p269 = scmp.eq.s32.totalorder %s41, 3
      %p270 = por %p268, %p269
      %p271 = scmp.ne.s32.totalorder %s262, %s263
      %p272 = scmp.eq.s32.totalorder %s41, 0
      %p273 = por %p271, %p272
      %p274 = scmp.ne.s32.totalorder %s262, %s263
      %p275 = scmp.eq.s32.totalorder %s42, 3
      %p276 = por %p274, %p275
      %p278 = scmp.ne.s32.totalorder %s263, %s277
      %p279 = scmp.eq.s32.totalorder %s42, 0
      %p280 = por %p278, %p279
      %s281 = ssub.s32 %s43, %s55
      %p282 = scmp.eq.s32.totalorder %s281, 0
      %s284 = sadd.s32 %s283, 1
      %s285 = scalar_select %p282, %s283, %s284
      %p288 = pneg %p282
      %p289 = scmp.eq.s32.totalorder %s36, 3
      %p290 = por %p288, %p289
      %p291 = scmp.ne.s32.totalorder %s283, %s286
      %p292 = scmp.eq.s32.totalorder %s36, 0
      %p293 = por %p291, %p292
      %p294 = scmp.ne.s32.totalorder %s283, %s286
      %p295 = scmp.eq.s32.totalorder %s41, 3
      %p296 = por %p294, %p295
      %p297 = scmp.ne.s32.totalorder %s286, %s287
      %p298 = scmp.eq.s32.totalorder %s41, 0
      %p299 = por %p297, %p298
      %p300 = scmp.ne.s32.totalorder %s286, %s287
      %p301 = scmp.eq.s32.totalorder %s42, 3
      %p302 = por %p300, %p301
      %p304 = scmp.ne.s32.totalorder %s287, %s303
      %p305 = scmp.eq.s32.totalorder %s42, 0
      %p306 = por %p304, %p305
      %s307 = ssub.s32 %s43, %s55
      %p308 = scmp.eq.s32.totalorder %s307, 0
      %s310 = sadd.s32 %s309, 1
      %s311 = scalar_select %p308, %s309, %s310
      %p314 = pneg %p308
      %p315 = scmp.eq.s32.totalorder %s36, 3
      %p316 = por %p314, %p315
      %p317 = scmp.ne.s32.totalorder %s309, %s312
      %p318 = scmp.eq.s32.totalorder %s36, 0
      %p319 = por %p317, %p318
      %p320 = scmp.ne.s32.totalorder %s309, %s312
      %p321 = scmp.eq.s32.totalorder %s41, 3
      %p322 = por %p320, %p321
      %p323 = scmp.ne.s32.totalorder %s312, %s313
      %p324 = scmp.eq.s32.totalorder %s41, 0
      %p325 = por %p323, %p324
      %p326 = scmp.ne.s32.totalorder %s312, %s313
      %p327 = scmp.eq.s32.totalorder %s42, 3
      %p328 = por %p326, %p327
      %p330 = scmp.ne.s32.totalorder %s313, %s329
      %p331 = scmp.eq.s32.totalorder %s42, 0
      %p332 = por %p330, %p331
      %s333 = ssub.s32 %s43, %s55
      %p334 = scmp.eq.s32.totalorder %s333, 0
      %s336 = sadd.s32 %s335, 1
      %s337 = scalar_select %p334, %s335, %s336
      %p340 = pneg %p334
      %p341 = scmp.eq.s32.totalorder %s36, 3
      %p342 = por %p340, %p341
      %p343 = scmp.ne.s32.totalorder %s335, %s338
      %p344 = scmp.eq.s32.totalorder %s36, 0
      %p345 = por %p343, %p344
      %p346 = scmp.ne.s32.totalorder %s335, %s338
      %p347 = scmp.eq.s32.totalorder %s41, 3
      %p348 = por %p346, %p347
      %p349 = scmp.ne.s32.totalorder %s338, %s339
      %p350 = scmp.eq.s32.totalorder %s41, 0
      %p351 = por %p349, %p350
      %p352 = scmp.ne.s32.totalorder %s338, %s339
      %p353 = scmp.eq.s32.totalorder %s42, 3
      %p354 = por %p352, %p353
      %p356 = scmp.ne.s32.totalorder %s339, %s355
      %p357 = scmp.eq.s32.totalorder %s42, 0
      %p358 = por %p356, %p357
      %p359 = scmp.le.s32.totalorder 1, %s36
      %p360 = scmp.lt.s32.totalorder %s36, 5
      %p361 = pnand %p359, %p360
      %p362 = pneg %p361
      // Predicated region
      $region9: #{tpu_custom_call.1} parent=5 // pred_check
        _
      $region10: #{tpu_custom_call.1} parent=5 // pred_check_branch
        %364 = sbr.rel (%p361) target = $region12
      $region11: #{tpu_custom_call.1} parent=5 // pred_region
        %s365 = ssub.s32 %s36, 1
        // Predicated region
        $region13: #{tpu_custom_call.1} parent=11 // pred_check
          %p366 = pneg %p231
        $region14: #{tpu_custom_call.1} parent=11 // pred_check_branch
          %368 = sbr.rel (%p366) target = $region16
        $region15: #{tpu_custom_call.1} parent=11 // pred_region
          _
        $region16: #{tpu_custom_call.1} parent=11 // pred_fallthru
          _
        // Predicated region
        $region17: #{tpu_custom_call.1} parent=11 // pred_check
          %p369 = pneg %p252
        $region18: #{tpu_custom_call.1} parent=11 // pred_check_branch
          %371 = sbr.rel (%p369) target = $region20
        $region19: #{tpu_custom_call.1} parent=11 // pred_region
          _
        $region20: #{tpu_custom_call.1} parent=11 // pred_fallthru
          _
        // Predicated region
        $region21: #{tpu_custom_call.1} parent=11 // pred_check
          %p372 = pneg %p273
        $region22: #{tpu_custom_call.1} parent=11 // pred_check_branch
          %374 = sbr.rel (%p372) target = $region24
        $region23: #{tpu_custom_call.1} parent=11 // pred_region
          _
        $region24: #{tpu_custom_call.1} parent=11 // pred_fallthru
          _
      $region12: #{tpu_custom_call.1} parent=5 // pred_fallthru
        _
      %p375 = scmp.lt.s32.totalorder %s36, 4
      // Predicated region
      $region25: #{tpu_custom_call.1} parent=5 // pred_check
        %p376 = pneg %p375
      $region26: #{tpu_custom_call.1} parent=5 // pred_check_branch
        %378 = sbr.rel (%p376) target = $region28
      $region27: #{tpu_custom_call.1} parent=5 // pred_region
        // Predicated region
        $region29: #{tpu_custom_call.1} parent=27 // pred_check
          %p379 = pneg %p70
        $region30: #{tpu_custom_call.1} parent=27 // pred_check_branch
          %381 = sbr.rel (%p379) target = $region32
        $region31: #{tpu_custom_call.1} parent=27 // pred_region
          %s382 = sand.u32 %s60, 1
          %s383 = scalar_lea.sflag [#allocation6], %s382
          %s384 = sand.u32 %s60, 1
          %s385 = smul.addr %s384, 64
          %s386 = scalar_lea.vmem [#allocation5], %s385
          %s387 = smul.u32 16, %s43
          %s389 = ssub.s32 1024, 1024
          %390 = vsyncadd %s383, %s389
          %s391 = smul.addr %s387, 2
          %s392 = sadd.s32 %s44, %s391
          %s393 = smul.addr %s392, 64
          %s394 = scalar_lea.hbm %s0, %s393
          %s395 = sshll.u32 %s386, 4
          %s396 = int_to_ptr.vmem [resolvable:$true] %s395
          %401 = dma.hbm_to_vmem [thread:$0]  %s394, 1024, %s396, %s383, 128, 64, 4
        $region32: #{tpu_custom_call.1} parent=27 // pred_fallthru
          _
        // Predicated region
        $region33: #{tpu_custom_call.1} parent=27 // pred_check
          %p402 = pneg %p98
        $region34: #{tpu_custom_call.1} parent=27 // pred_check_branch
          %404 = sbr.rel (%p402) target = $region36
        $region35: #{tpu_custom_call.1} parent=27 // pred_region
          %s405 = sand.u32 %s36, 1
          %s406 = scalar_lea.sflag [#allocation9], %s405
          %s407 = sand.u32 %s88, 1
          %s408 = smul.addr %s407, 64
          %s409 = scalar_lea.vmem [#allocation8], %s408
          %s410 = smul.u32 16, %s43
          %s412 = ssub.s32 1024, 1024
          %413 = vsyncadd %s406, %s412
          %s414 = smul.addr %s410, 2
          %s415 = sadd.s32 %s44, %s414
          %s416 = smul.addr %s415, 64
          %s417 = scalar_lea.hbm %s1, %s416
          %s418 = sshll.u32 %s409, 4
          %s419 = int_to_ptr.vmem [resolvable:$true] %s418
          %424 = dma.hbm_to_vmem [thread:$0]  %s417, 1024, %s419, %s406, 128, 64, 4
        $region36: #{tpu_custom_call.1} parent=27 // pred_fallthru
          _
        // Predicated region
        $region37: #{tpu_custom_call.1} parent=27 // pred_check
          %p425 = pneg %p126
        $region38: #{tpu_custom_call.1} parent=27 // pred_check_branch
          %427 = sbr.rel (%p425) target = $region40
        $region39: #{tpu_custom_call.1} parent=27 // pred_region
          %s428 = sand.u32 %s36, 1
          %s429 = scalar_lea.sflag [#allocation9], %s428
          %s430 = sand.u32 %s116, 1
          %s431 = smul.addr %s430, 64
          %s432 = scalar_lea.vmem [#allocation10], %s431
          %s433 = smul.u32 16, %s43
          %s435 = ssub.s32 1024, 1024
          %436 = vsyncadd %s429, %s435
          %s437 = smul.addr %s433, 2
          %s438 = sadd.s32 %s44, %s437
          %s439 = smul.addr %s438, 64
          %s440 = scalar_lea.hbm %s2, %s439
          %s441 = sshll.u32 %s432, 4
          %s442 = int_to_ptr.vmem [resolvable:$true] %s441
          %447 = dma.hbm_to_vmem [thread:$0]  %s440, 1024, %s442, %s429, 128, 64, 4
        $region40: #{tpu_custom_call.1} parent=27 // pred_fallthru
          _
        // Predicated region
        $region41: #{tpu_custom_call.1} parent=27 // pred_check
          %p448 = pneg %p152
        $region42: #{tpu_custom_call.1} parent=27 // pred_check_branch
          %450 = sbr.rel (%p448) target = $region44
        $region43: #{tpu_custom_call.1} parent=27 // pred_region
          %s451 = sand.u32 %s36, 1
          %s452 = scalar_lea.sflag [#allocation12], %s451
          %s453 = sand.u32 %s142, 1
          %s454 = smul.addr %s453, 128
          %s455 = scalar_lea.vmem [#allocation11], %s454
          %s456 = smul.u32 16, %s44
          %s458 = ssub.s32 2048, 2048
          %459 = vsyncadd %s452, %s458
          %s460 = smul.addr %s456, 2
          %s461 = smul.addr %s460, 64
          %s462 = scalar_lea.hbm %s3, %s461
          %s463 = sshll.u32 %s455, 4
          %s464 = int_to_ptr.vmem [resolvable:$true] %s463
          %469 = dma.hbm_to_vmem [thread:$0]  %s462, 2048, %s464, %s452, 128, 128, 8
        $region44: #{tpu_custom_call.1} parent=27 // pred_fallthru
          _
        // Predicated region
        $region45: #{tpu_custom_call.1} parent=27 // pred_check
          %p470 = pneg %p178
        $region46: #{tpu_custom_call.1} parent=27 // pred_check_branch
          %472 = sbr.rel (%p470) target = $region48
        $region47: #{tpu_custom_call.1} parent=27 // pred_region
          %s473 = sand.u32 %s36, 1
          %s474 = scalar_lea.sflag [#allocation12], %s473
          %s475 = sand.u32 %s168, 1
          %s476 = smul.addr %s475, 128
          %s477 = scalar_lea.vmem [#allocation13], %s476
          %s478 = smul.u32 16, %s44
          %s480 = ssub.s32 2048, 2048
          %481 = vsyncadd %s474, %s480
          %s482 = smul.addr %s478, 2
          %s483 = smul.addr %s482, 64
          %s484 = scalar_lea.hbm %s4, %s483
          %s485 = sshll.u32 %s477, 4
          %s486 = int_to_ptr.vmem [resolvable:$true] %s485
          %491 = dma.hbm_to_vmem [thread:$0]  %s484, 2048, %s486, %s474, 128, 128, 8
        $region48: #{tpu_custom_call.1} parent=27 // pred_fallthru
          _
        // Predicated region
        $region49: #{tpu_custom_call.1} parent=27 // pred_check
          %p492 = pneg %p204
        $region50: #{tpu_custom_call.1} parent=27 // pred_check_branch
          %494 = sbr.rel (%p492) target = $region52
        $region51: #{tpu_custom_call.1} parent=27 // pred_region
          %s495 = sand.u32 %s194, 1
          %s496 = scalar_lea.sflag [#allocation15], %s495
          %s497 = sand.u32 %s194, 1
          %s498 = smul.addr %s497, 128
          %s499 = scalar_lea.vmem [#allocation14], %s498
          %s500 = smul.u32 16, %s44
          %s502 = ssub.s32 2048, 2048
          %503 = vsyncadd %s496, %s502
          %s504 = smul.addr %s500, 2
          %s505 = smul.addr %s504, 64
          %s506 = scalar_lea.hbm %s5, %s505
          %s507 = sshll.u32 %s499, 4
          %s508 = int_to_ptr.vmem [resolvable:$true] %s507
          %513 = dma.hbm_to_vmem [thread:$0]  %s506, 2048, %s508, %s496, 128, 128, 8
        $region52: #{tpu_custom_call.1} parent=27 // pred_fallthru
          _
      $region28: #{tpu_custom_call.1} parent=5 // pred_fallthru
        _
      %p514 = scmp.le.s32.totalorder 1, %s36
      %p515 = scmp.lt.s32.totalorder %s36, 5
      %p516 = pnand %p514, %p515
      %p517 = pneg %p516
      // Predicated region
      $region53: #{tpu_custom_call.1} parent=5 // pred_check
        _
      $region54: #{tpu_custom_call.1} parent=5 // pred_check_branch
        %519 = sbr.rel (%p516) target = $region56
      $region55: #{tpu_custom_call.1} parent=5 // pred_region
        %s520 = ssub.s32 %s36, 1
        %s521 = sand.u32 %s63, 1
        %s522 = scalar_lea.sflag [#allocation6], %s521
        %s523 = sand.u32 %s63, 1
        %s524 = smul.addr %s523, 64
        %s525 = scalar_lea.vmem [#allocation5], %s524
        // Predicated region
        $region57: #{tpu_custom_call.1} parent=55 // pred_check
          %p526 = pneg %p76
        $region58: #{tpu_custom_call.1} parent=55 // pred_check_branch
          %528 = sbr.rel (%p526) target = $region60
        $region59: #{tpu_custom_call.1} parent=55 // pred_region
          %529 = dma.done %s522, 1024
        $region60: #{tpu_custom_call.1} parent=55 // pred_fallthru
          _
        %s530 = sand.u32 %s41, 1
        %s531 = scalar_lea.sflag [#allocation9], %s530
        %s532 = sand.u32 %s91, 1
        %s533 = smul.addr %s532, 64
        %s534 = scalar_lea.vmem [#allocation8], %s533
        // Predicated region
        $region61: #{tpu_custom_call.1} parent=55 // pred_check
          %p535 = pneg %p104
        $region62: #{tpu_custom_call.1} parent=55 // pred_check_branch
          %537 = sbr.rel (%p535) target = $region64
        $region63: #{tpu_custom_call.1} parent=55 // pred_region
          %538 = dma.done %s531, 1024
        $region64: #{tpu_custom_call.1} parent=55 // pred_fallthru
          _
        %s539 = sand.u32 %s41, 1
        %s540 = scalar_lea.sflag [#allocation9], %s539
        %s541 = sand.u32 %s119, 1
        %s542 = smul.addr %s541, 64
        %s543 = scalar_lea.vmem [#allocation10], %s542
        // Predicated region
        $region65: #{tpu_custom_call.1} parent=55 // pred_check
          %p544 = pneg %p132
        $region66: #{tpu_custom_call.1} parent=55 // pred_check_branch
          %546 = sbr.rel (%p544) target = $region68
        $region67: #{tpu_custom_call.1} parent=55 // pred_region
          %547 = dma.done %s540, 1024
        $region68: #{tpu_custom_call.1} parent=55 // pred_fallthru
          _
        %s548 = sand.u32 %s41, 1
        %s549 = scalar_lea.sflag [#allocation12], %s548
        %s550 = sand.u32 %s145, 1
        %s551 = smul.addr %s550, 128
        %s552 = scalar_lea.vmem [#allocation11], %s551
        // Predicated region
        $region69: #{tpu_custom_call.1} parent=55 // pred_check
          %p553 = pneg %p158
        $region70: #{tpu_custom_call.1} parent=55 // pred_check_branch
          %555 = sbr.rel (%p553) target = $region72
        $region71: #{tpu_custom_call.1} parent=55 // pred_region
          %556 = dma.done %s549, 2048
        $region72: #{tpu_custom_call.1} parent=55 // pred_fallthru
          _
        %s557 = sand.u32 %s41, 1
        %s558 = scalar_lea.sflag [#allocation12], %s557
        %s559 = sand.u32 %s171, 1
        %s560 = smul.addr %s559, 128
        %s561 = scalar_lea.vmem [#allocation13], %s560
        // Predicated region
        $region73: #{tpu_custom_call.1} parent=55 // pred_check
          %p562 = pneg %p184
        $region74: #{tpu_custom_call.1} parent=55 // pred_check_branch
          %564 = sbr.rel (%p562) target = $region76
        $region75: #{tpu_custom_call.1} parent=55 // pred_region
          %565 = dma.done %s558, 2048
        $region76: #{tpu_custom_call.1} parent=55 // pred_fallthru
          _
        %s566 = sand.u32 %s197, 1
        %s567 = scalar_lea.sflag [#allocation15], %s566
        %s568 = sand.u32 %s197, 1
        %s569 = smul.addr %s568, 128
        %s570 = scalar_lea.vmem [#allocation14], %s569
        // Predicated region
        $region77: #{tpu_custom_call.1} parent=55 // pred_check
          %p571 = pneg %p210
        $region78: #{tpu_custom_call.1} parent=55 // pred_check_branch
          %573 = sbr.rel (%p571) target = $region80
        $region79: #{tpu_custom_call.1} parent=55 // pred_region
          %574 = dma.done %s567, 2048
        $region80: #{tpu_custom_call.1} parent=55 // pred_fallthru
          _
        %s575 = sand.u32 %s63, 1
        %s576 = scalar_lea.sflag [#allocation6], %s575
        %s577 = sand.u32 %s63, 1
        %s578 = smul.addr %s577, 64
        %s579 = scalar_lea.vmem [#allocation5], %s578
        %p580 = pneg %p76
        %p581 = pneg %p73
        %s582 = sand.u32 %s41, 1
        %s583 = scalar_lea.sflag [#allocation9], %s582
        %s584 = sand.u32 %s91, 1
        %s585 = smul.addr %s584, 64
        %s586 = scalar_lea.vmem [#allocation8], %s585
        %p587 = pneg %p104
        %p588 = pneg %p101
        %s589 = sand.u32 %s41, 1
        %s590 = scalar_lea.sflag [#allocation9], %s589
        %s591 = sand.u32 %s119, 1
        %s592 = smul.addr %s591, 64
        %s593 = scalar_lea.vmem [#allocation10], %s592
        %p594 = pneg %p132
        %p595 = pneg %p129
        %s596 = sand.u32 %s41, 1
        %s597 = scalar_lea.sflag [#allocation12], %s596
        %s598 = sand.u32 %s145, 1
        %s599 = smul.addr %s598, 128
        %s600 = scalar_lea.vmem [#allocation11], %s599
        %p601 = pneg %p158
        %p602 = pneg %p155
        %s603 = sand.u32 %s41, 1
        %s604 = scalar_lea.sflag [#allocation12], %s603
        %s605 = sand.u32 %s171, 1
        %s606 = smul.addr %s605, 128
        %s607 = scalar_lea.vmem [#allocation13], %s606
        %p608 = pneg %p184
        %p609 = pneg %p181
        %s610 = sand.u32 %s197, 1
        %s611 = scalar_lea.sflag [#allocation15], %s610
        %s612 = sand.u32 %s197, 1
        %s613 = smul.addr %s612, 128
        %s614 = scalar_lea.vmem [#allocation14], %s613
        %p615 = pneg %p210
        %p616 = pneg %p207
        %p617 = pneg %p231
        %p618 = pneg %p228
        %p619 = pneg %p252
        %p620 = pneg %p249
        %p621 = pneg %p273
        %p622 = pneg %p270
        %p623 = pneg %p299
        %p624 = pneg %p296
        %s625 = sand.u32 %s286, 1
        %s626 = scalar_lea.sflag [#allocation7], %s625
        %s627 = sand.u32 %s286, 1
        %s628 = smul.addr %s627, 256
        %s629 = scalar_lea.vmem [#allocation16], %s628
        %p630 = pneg %p325
        %p631 = pneg %p322
        %s632 = sand.u32 %s41, 1
        %s633 = scalar_lea.sflag [#allocation18], %s632
        %s634 = sand.u32 %s312, 1
        %s635 = smul.addr %s634, 256
        %s636 = scalar_lea.vmem [#allocation17], %s635
        %p637 = pneg %p351
        %p638 = pneg %p348
        %s639 = sand.u32 %s41, 1
        %s640 = scalar_lea.sflag [#allocation18], %s639
        %s641 = sand.u32 %s338, 1
        %s642 = smul.addr %s641, 256
        %s643 = scalar_lea.vmem [#allocation19], %s642
        %s644 = smul.u32 16, %s45
        %s645 = smul.u32 16, %s45
        %s646 = smul.u32 16, %s45
        %s647 = smul.u32 16, %s46
        %s648 = smul.u32 16, %s46
        %s649 = smul.u32 16, %s46
        %s650 = smul.u32 16, %s45
        %s651 = smul.u32 16, %s45
        %s652 = smul.u32 16, %s45
        %p654 = scmp.eq.s32.totalorder %s46, 0
        // Predicated region
        $region81: #{tpu_custom_call.1} parent=55 // pred_check
          %p655 = pneg %p654
        $region82: #{tpu_custom_call.1} parent=55 // pred_check_branch
          %657 = sbr.rel (%p655) target = $region84
        $region83: #{tpu_custom_call.1} parent=55 // pred_region
          %658 = vst [vmem:[#allocation2] sm:$0xff] 0.0
          %659 = vst [vmem:[#allocation2 + $0x8] sm:$0xff] 0.0
          %660 = vst [vmem:[#allocation2 + $0x10] sm:$0xff] 0.0
          %661 = vst [vmem:[#allocation2 + $0x18] sm:$0xff] 0.0
          %662 = vst [vmem:[#allocation2 + $0x20] sm:$0xff] 0.0
          %663 = vst [vmem:[#allocation2 + $0x28] sm:$0xff] 0.0
          %664 = vst [vmem:[#allocation2 + $0x30] sm:$0xff] 0.0
          %665 = vst [vmem:[#allocation2 + $0x38] sm:$0xff] 0.0
          %666 = vst [vmem:[#allocation2 + $0x40] sm:$0xff] 0.0
          %667 = vst [vmem:[#allocation2 + $0x48] sm:$0xff] 0.0
          %668 = vst [vmem:[#allocation2 + $0x50] sm:$0xff] 0.0
          %669 = vst [vmem:[#allocation2 + $0x58] sm:$0xff] 0.0
          %670 = vst [vmem:[#allocation2 + $0x60] sm:$0xff] 0.0
          %671 = vst [vmem:[#allocation2 + $0x68] sm:$0xff] 0.0
          %672 = vst [vmem:[#allocation2 + $0x70] sm:$0xff] 0.0
          %673 = vst [vmem:[#allocation2 + $0x78] sm:$0xff] 0.0
          %674 = vst [vmem:[#allocation2 + $0x80] sm:$0xff] 0.0
          %675 = vst [vmem:[#allocation2 + $0x88] sm:$0xff] 0.0
          %676 = vst [vmem:[#allocation2 + $0x90] sm:$0xff] 0.0
          %677 = vst [vmem:[#allocation2 + $0x98] sm:$0xff] 0.0
          %678 = vst [vmem:[#allocation2 + $0xa0] sm:$0xff] 0.0
          %679 = vst [vmem:[#allocation2 + $0xa8] sm:$0xff] 0.0
          %680 = vst [vmem:[#allocation2 + $0xb0] sm:$0xff] 0.0
          %681 = vst [vmem:[#allocation2 + $0xb8] sm:$0xff] 0.0
          %682 = vst [vmem:[#allocation2 + $0xc0] sm:$0xff] 0.0
          %683 = vst [vmem:[#allocation2 + $0xc8] sm:$0xff] 0.0
          %684 = vst [vmem:[#allocation2 + $0xd0] sm:$0xff] 0.0
          %685 = vst [vmem:[#allocation2 + $0xd8] sm:$0xff] 0.0
          %686 = vst [vmem:[#allocation2 + $0xe0] sm:$0xff] 0.0
          %687 = vst [vmem:[#allocation2 + $0xe8] sm:$0xff] 0.0
          %688 = vst [vmem:[#allocation2 + $0xf0] sm:$0xff] 0.0
          %689 = vst [vmem:[#allocation2 + $0xf8] sm:$0xff] 0.0
          %690 = vst [vmem:[#allocation3] sm:$0xff] 0.0
          %691 = vst [vmem:[#allocation3 + $0x8] sm:$0xff] 0.0
          %692 = vst [vmem:[#allocation3 + $0x10] sm:$0xff] 0.0
          %693 = vst [vmem:[#allocation3 + $0x18] sm:$0xff] 0.0
          %694 = vst [vmem:[#allocation3 + $0x20] sm:$0xff] 0.0
          %695 = vst [vmem:[#allocation3 + $0x28] sm:$0xff] 0.0
          %696 = vst [vmem:[#allocation3 + $0x30] sm:$0xff] 0.0
          %697 = vst [vmem:[#allocation3 + $0x38] sm:$0xff] 0.0
          %698 = vst [vmem:[#allocation3 + $0x40] sm:$0xff] 0.0
          %699 = vst [vmem:[#allocation3 + $0x48] sm:$0xff] 0.0
          %700 = vst [vmem:[#allocation3 + $0x50] sm:$0xff] 0.0
          %701 = vst [vmem:[#allocation3 + $0x58] sm:$0xff] 0.0
          %702 = vst [vmem:[#allocation3 + $0x60] sm:$0xff] 0.0
          %703 = vst [vmem:[#allocation3 + $0x68] sm:$0xff] 0.0
          %704 = vst [vmem:[#allocation3 + $0x70] sm:$0xff] 0.0
          %705 = vst [vmem:[#allocation3 + $0x78] sm:$0xff] 0.0
          %706 = vst [vmem:[#allocation3 + $0x80] sm:$0xff] 0.0
          %707 = vst [vmem:[#allocation3 + $0x88] sm:$0xff] 0.0
          %708 = vst [vmem:[#allocation3 + $0x90] sm:$0xff] 0.0
          %709 = vst [vmem:[#allocation3 + $0x98] sm:$0xff] 0.0
          %710 = vst [vmem:[#allocation3 + $0xa0] sm:$0xff] 0.0
          %711 = vst [vmem:[#allocation3 + $0xa8] sm:$0xff] 0.0
          %712 = vst [vmem:[#allocation3 + $0xb0] sm:$0xff] 0.0
          %713 = vst [vmem:[#allocation3 + $0xb8] sm:$0xff] 0.0
          %714 = vst [vmem:[#allocation3 + $0xc0] sm:$0xff] 0.0
          %715 = vst [vmem:[#allocation3 + $0xc8] sm:$0xff] 0.0
          %716 = vst [vmem:[#allocation3 + $0xd0] sm:$0xff] 0.0
          %717 = vst [vmem:[#allocation3 + $0xd8] sm:$0xff] 0.0
          %718 = vst [vmem:[#allocation3 + $0xe0] sm:$0xff] 0.0
          %719 = vst [vmem:[#allocation3 + $0xe8] sm:$0xff] 0.0
          %720 = vst [vmem:[#allocation3 + $0xf0] sm:$0xff] 0.0
          %721 = vst [vmem:[#allocation3 + $0xf8] sm:$0xff] 0.0
          %722 = vst [vmem:[#allocation4] sm:$0xff] 0.0
          %723 = vst [vmem:[#allocation4 + $0x8] sm:$0xff] 0.0
          %724 = vst [vmem:[#allocation4 + $0x10] sm:$0xff] 0.0
          %725 = vst [vmem:[#allocation4 + $0x18] sm:$0xff] 0.0
          %726 = vst [vmem:[#allocation4 + $0x20] sm:$0xff] 0.0
          %727 = vst [vmem:[#allocation4 + $0x28] sm:$0xff] 0.0
          %728 = vst [vmem:[#allocation4 + $0x30] sm:$0xff] 0.0
          %729 = vst [vmem:[#allocation4 + $0x38] sm:$0xff] 0.0
          %730 = vst [vmem:[#allocation4 + $0x40] sm:$0xff] 0.0
          %731 = vst [vmem:[#allocation4 + $0x48] sm:$0xff] 0.0
          %732 = vst [vmem:[#allocation4 + $0x50] sm:$0xff] 0.0
          %733 = vst [vmem:[#allocation4 + $0x58] sm:$0xff] 0.0
          %734 = vst [vmem:[#allocation4 + $0x60] sm:$0xff] 0.0
          %735 = vst [vmem:[#allocation4 + $0x68] sm:$0xff] 0.0
          %736 = vst [vmem:[#allocation4 + $0x70] sm:$0xff] 0.0
          %737 = vst [vmem:[#allocation4 + $0x78] sm:$0xff] 0.0
          %738 = vst [vmem:[#allocation4 + $0x80] sm:$0xff] 0.0
          %739 = vst [vmem:[#allocation4 + $0x88] sm:$0xff] 0.0
          %740 = vst [vmem:[#allocation4 + $0x90] sm:$0xff] 0.0
          %741 = vst [vmem:[#allocation4 + $0x98] sm:$0xff] 0.0
          %742 = vst [vmem:[#allocation4 + $0xa0] sm:$0xff] 0.0
          %743 = vst [vmem:[#allocation4 + $0xa8] sm:$0xff] 0.0
          %744 = vst [vmem:[#allocation4 + $0xb0] sm:$0xff] 0.0
          %745 = vst [vmem:[#allocation4 + $0xb8] sm:$0xff] 0.0
          %746 = vst [vmem:[#allocation4 + $0xc0] sm:$0xff] 0.0
          %747 = vst [vmem:[#allocation4 + $0xc8] sm:$0xff] 0.0
          %748 = vst [vmem:[#allocation4 + $0xd0] sm:$0xff] 0.0
          %749 = vst [vmem:[#allocation4 + $0xd8] sm:$0xff] 0.0
          %750 = vst [vmem:[#allocation4 + $0xe0] sm:$0xff] 0.0
          %751 = vst [vmem:[#allocation4 + $0xe8] sm:$0xff] 0.0
          %752 = vst [vmem:[#allocation4 + $0xf0] sm:$0xff] 0.0
          %753 = vst [vmem:[#allocation4 + $0xf8] sm:$0xff] 0.0
        $region84: #{tpu_custom_call.1} parent=55 // pred_fallthru
          _
        %v754 = vld [vmem:[#allocation2] sm:$0xff]
        %v755 = vld [vmem:[#allocation2 + $0x8] sm:$0xff]
        %v756 = vld [vmem:[#allocation2 + $0x10] sm:$0xff]
        %v757 = vld [vmem:[#allocation2 + $0x18] sm:$0xff]
        %v758 = vld [vmem:[#allocation2 + $0x20] sm:$0xff]
        %v759 = vld [vmem:[#allocation2 + $0x28] sm:$0xff]
        %v760 = vld [vmem:[#allocation2 + $0x30] sm:$0xff]
        %v761 = vld [vmem:[#allocation2 + $0x38] sm:$0xff]
        %v762 = vld [vmem:[#allocation2 + $0x40] sm:$0xff]
        %v763 = vld [vmem:[#allocation2 + $0x48] sm:$0xff]
        %v764 = vld [vmem:[#allocation2 + $0x50] sm:$0xff]
        %v765 = vld [vmem:[#allocation2 + $0x58] sm:$0xff]
        %v766 = vld [vmem:[#allocation2 + $0x60] sm:$0xff]
        %v767 = vld [vmem:[#allocation2 + $0x68] sm:$0xff]
        %v768 = vld [vmem:[#allocation2 + $0x70] sm:$0xff]
        %v769 = vld [vmem:[#allocation2 + $0x78] sm:$0xff]
        %v770 = vld [vmem:[#allocation2 + $0x80] sm:$0xff]
        %v771 = vld [vmem:[#allocation2 + $0x88] sm:$0xff]
        %v772 = vld [vmem:[#allocation2 + $0x90] sm:$0xff]
        %v773 = vld [vmem:[#allocation2 + $0x98] sm:$0xff]
        %v774 = vld [vmem:[#allocation2 + $0xa0] sm:$0xff]
        %v775 = vld [vmem:[#allocation2 + $0xa8] sm:$0xff]
        %v776 = vld [vmem:[#allocation2 + $0xb0] sm:$0xff]
        %v777 = vld [vmem:[#allocation2 + $0xb8] sm:$0xff]
        %v778 = vld [vmem:[#allocation2 + $0xc0] sm:$0xff]
        %v779 = vld [vmem:[#allocation2 + $0xc8] sm:$0xff]
        %v780 = vld [vmem:[#allocation2 + $0xd0] sm:$0xff]
        %v781 = vld [vmem:[#allocation2 + $0xd8] sm:$0xff]
        %v782 = vld [vmem:[#allocation2 + $0xe0] sm:$0xff]
        %v783 = vld [vmem:[#allocation2 + $0xe8] sm:$0xff]
        %v784 = vld [vmem:[#allocation2 + $0xf0] sm:$0xff]
        %v785 = vld [vmem:[#allocation2 + $0xf8] sm:$0xff]
        %v786 = vld [vmem:[%s525] sm:$0xf]
        %v787 = vld [vmem:[%s525 + $0x4] sm:$0xf]
        %v788 = vld [vmem:[%s525 + $0x8] sm:$0xf]
        %v789 = vld [vmem:[%s525 + $0xc] sm:$0xf]
        %v790 = vld [vmem:[%s525 + $0x10] sm:$0xf]
        %v791 = vld [vmem:[%s525 + $0x14] sm:$0xf]
        %v792 = vld [vmem:[%s525 + $0x18] sm:$0xf]
        %v793 = vld [vmem:[%s525 + $0x1c] sm:$0xf]
        %v794 = vld [vmem:[%s525 + $0x20] sm:$0xf]
        %v795 = vld [vmem:[%s525 + $0x24] sm:$0xf]
        %v796 = vld [vmem:[%s525 + $0x28] sm:$0xf]
        %v797 = vld [vmem:[%s525 + $0x2c] sm:$0xf]
        %v798 = vld [vmem:[%s525 + $0x30] sm:$0xf]
        %v799 = vld [vmem:[%s525 + $0x34] sm:$0xf]
        %v800 = vld [vmem:[%s525 + $0x38] sm:$0xf]
        %v801 = vld [vmem:[%s525 + $0x3c] sm:$0xf]
        %v802 = vld [vmem:[%s552] sm:$0xff]
        %v803 = vld [vmem:[%s552 + $0x8] sm:$0xff]
        %v804 = vld [vmem:[%s552 + $0x10] sm:$0xff]
        %v805 = vld [vmem:[%s552 + $0x18] sm:$0xff]
        %v806 = vld [vmem:[%s552 + $0x20] sm:$0xff]
        %v807 = vld [vmem:[%s552 + $0x28] sm:$0xff]
        %v808 = vld [vmem:[%s552 + $0x30] sm:$0xff]
        %v809 = vld [vmem:[%s552 + $0x38] sm:$0xff]
        %v810 = vld [vmem:[%s552 + $0x40] sm:$0xff]
        %v811 = vld [vmem:[%s552 + $0x48] sm:$0xff]
        %v812 = vld [vmem:[%s552 + $0x50] sm:$0xff]
        %v813 = vld [vmem:[%s552 + $0x58] sm:$0xff]
        %v814 = vld [vmem:[%s552 + $0x60] sm:$0xff]
        %v815 = vld [vmem:[%s552 + $0x68] sm:$0xff]
        %v816 = vld [vmem:[%s552 + $0x70] sm:$0xff]
        %v817 = vld [vmem:[%s552 + $0x78] sm:$0xff]
        %v834 = vunpack.c.l.b16 %v786
        %v835 = vunpack.c.l.b16 %v787
        %v836 = vunpack.c.l.b16 %v788
        %v837 = vunpack.c.l.b16 %v789
        %v838 = vunpack.c.l.b16 %v790
        %v839 = vunpack.c.l.b16 %v791
        %v840 = vunpack.c.l.b16 %v792
        %v841 = vunpack.c.l.b16 %v793
        %v842 = vunpack.c.l.b16 %v794
        %v843 = vunpack.c.l.b16 %v795
        %v844 = vunpack.c.l.b16 %v796
        %v845 = vunpack.c.l.b16 %v797
        %v846 = vunpack.c.l.b16 %v798
        %v847 = vunpack.c.l.b16 %v799
        %v848 = vunpack.c.l.b16 %v800
        %v849 = vunpack.c.l.b16 %v801
        %v850 = vpack.c.b16 %v835, %v834
        %v851 = vpack.c.b16 %v837, %v836
        %v852 = vpack.c.b16 %v839, %v838
        %v853 = vpack.c.b16 %v841, %v840
        %v854 = vpack.c.b16 %v843, %v842
        %v855 = vpack.c.b16 %v845, %v844
        %v856 = vpack.c.b16 %v847, %v846
        %v857 = vpack.c.b16 %v849, %v848
        %v882 = vunpack.c.l.b16 %v802
        %v883 = vunpack.c.h.b16 %v802
        %v884 = vunpack.c.l.b16 %v803
        %v885 = vunpack.c.h.b16 %v803
        %v886 = vunpack.c.l.b16 %v804
        %v887 = vunpack.c.h.b16 %v804
        %v888 = vunpack.c.l.b16 %v805
        %v889 = vunpack.c.h.b16 %v805
        %v890 = vunpack.c.l.b16 %v806
        %v891 = vunpack.c.h.b16 %v806
        %v892 = vunpack.c.l.b16 %v807
        %v893 = vunpack.c.h.b16 %v807
        %v894 = vunpack.c.l.b16 %v808
        %v895 = vunpack.c.h.b16 %v808
        %v896 = vunpack.c.l.b16 %v809
        %v897 = vunpack.c.h.b16 %v809
        %v898 = vunpack.c.l.b16 %v810
        %v899 = vunpack.c.h.b16 %v810
        %v900 = vunpack.c.l.b16 %v811
        %v901 = vunpack.c.h.b16 %v811
        %v902 = vunpack.c.l.b16 %v812
        %v903 = vunpack.c.h.b16 %v812
        %v904 = vunpack.c.l.b16 %v813
        %v905 = vunpack.c.h.b16 %v813
        %v906 = vunpack.c.l.b16 %v814
        %v907 = vunpack.c.h.b16 %v814
        %v908 = vunpack.c.l.b16 %v815
        %v909 = vunpack.c.h.b16 %v815
        %v910 = vunpack.c.l.b16 %v816
        %v911 = vunpack.c.h.b16 %v816
        %v912 = vunpack.c.l.b16 %v817
        %v913 = vunpack.c.h.b16 %v817
        %v914 = vpack.c.b16 %v884, %v882
        %v915 = vpack.c.b16 %v885, %v883
        %v916 = vpack.c.b16 %v888, %v886
        %v917 = vpack.c.b16 %v889, %v887
        %v918 = vpack.c.b16 %v892, %v890
        %v919 = vpack.c.b16 %v893, %v891
        %v920 = vpack.c.b16 %v896, %v894
        %v921 = vpack.c.b16 %v897, %v895
        %v922 = vpack.c.b16 %v900, %v898
        %v923 = vpack.c.b16 %v901, %v899
        %v924 = vpack.c.b16 %v904, %v902
        %v925 = vpack.c.b16 %v905, %v903
        %v926 = vpack.c.b16 %v908, %v906
        %v927 = vpack.c.b16 %v909, %v907
        %v928 = vpack.c.b16 %v912, %v910
        %v929 = vpack.c.b16 %v913, %v911
        %946 = vmatprep.subr.bf16.mxu0 %v915
        %947 = vmatpush1.bf16.msra.mxu0 %v914
        %948 = vmatprep.subr.bf16.mxu0 %v917
        %949 = vmatpush1.bf16.msra.mxu0 %v916
        %950 = vmatprep.subr.bf16.mxu0 %v919
        %951 = vmatpush1.bf16.msra.mxu0 %v918
        %952 = vmatprep.subr.bf16.mxu0 %v921
        %953 = vmatpush1.bf16.msra.mxu0 %v920
        %954 = vmatprep.subr.bf16.mxu0 %v923
        %955 = vmatpush1.bf16.msra.mxu0 %v922
        %956 = vmatprep.subr.bf16.mxu0 %v925
        %957 = vmatpush1.bf16.msra.mxu0 %v924
        %958 = vmatprep.subr.bf16.mxu0 %v927
        %959 = vmatpush1.bf16.msra.mxu0 %v926
        %960 = vmatprep.subr.bf16.mxu0 %v929
        %961 = vmatpush1.bf16.msra.mxu0 %v928
        %962 = vmatprep.subr.bf16.mxu0 0
        %963 = vmatpush1.bf16.msra.mxu0 0
        %964 = vmatprep.subr.bf16.mxu0 0
        %965 = vmatpush1.bf16.msra.mxu0 0
        %966 = vmatprep.subr.bf16.mxu0 0
        %967 = vmatpush1.bf16.msra.mxu0 0
        %968 = vmatprep.subr.bf16.mxu0 0
        %969 = vmatpush1.bf16.msra.mxu0 0
        %970 = vmatprep.subr.bf16.mxu0 0
        %971 = vmatpush1.bf16.msra.mxu0 0
        %972 = vmatprep.subr.bf16.mxu0 0
        %973 = vmatpush1.bf16.msra.mxu0 0
        %974 = vmatprep.subr.bf16.mxu0 0
        %975 = vmatpush1.bf16.msra.mxu0 0
        %976 = vmatprep.subr.bf16.mxu0 0
        %977 = vmatpush1.bf16.msra.mxu0 0
        %978 = vmatprep.mubr.bf16.mxu0 0
        %979 = vmatmul.mubr.bf16.gmra.mrb[0].mxu0 %v850
        %v980 = vpop.f32.mrb[0].mxu0
        %v981 = vadd.f32 0.0, %v980
        %v982 = vpop.f32.mrb[0].mxu0
        %v983 = vadd.f32 0.0, %v982
        %v984 = vpop.f32.mrb[0].mxu0
        %v985 = vadd.f32 0.0, %v984
        %v986 = vpop.f32.mrb[0].mxu0
        %v987 = vadd.f32 0.0, %v986
        %988 = vmatprep.mubr.bf16.mxu0 0
        %989 = vmatmul.mubr.bf16.gmra.mrb[0].mxu0 %v851
        %v990 = vpop.f32.mrb[0].mxu0
        %v991 = vadd.f32 0.0, %v990
        %v992 = vpop.f32.mrb[0].mxu0
        %v993 = vadd.f32 0.0, %v992
        %v994 = vpop.f32.mrb[0].mxu0
        %v995 = vadd.f32 0.0, %v994
        %v996 = vpop.f32.mrb[0].mxu0
        %v997 = vadd.f32 0.0, %v996
        %998 = vmatprep.mubr.bf16.mxu0 0
        %999 = vmatmul.mubr.bf16.gmra.mrb[0].mxu0 %v852
        %v1000 = vpop.f32.mrb[0].mxu0
        %v1001 = vadd.f32 0.0, %v1000
        %v1002 = vpop.f32.mrb[0].mxu0
        %v1003 = vadd.f32 0.0, %v1002
        %v1004 = vpop.f32.mrb[0].mxu0
        %v1005 = vadd.f32 0.0, %v1004
        %v1006 = vpop.f32.mrb[0].mxu0
        %v1007 = vadd.f32 0.0, %v1006
        %1008 = vmatprep.mubr.bf16.mxu0 0
        %1009 = vmatmul.mubr.bf16.gmra.mrb[0].mxu0 %v853
        %v1010 = vpop.f32.mrb[0].mxu0
        %v1011 = vadd.f32 0.0, %v1010
        %v1012 = vpop.f32.mrb[0].mxu0
        %v1013 = vadd.f32 0.0, %v1012
        %v1014 = vpop.f32.mrb[0].mxu0
        %v1015 = vadd.f32 0.0, %v1014
        %v1016 = vpop.f32.mrb[0].mxu0
        %v1017 = vadd.f32 0.0, %v1016
        %1018 = vmatprep.mubr.bf16.mxu0 0
        %1019 = vmatmul.mubr.bf16.gmra.mrb[0].mxu0 %v854
        %v1020 = vpop.f32.mrb[0].mxu0
        %v1021 = vadd.f32 0.0, %v1020
        %v1022 = vpop.f32.mrb[0].mxu0
        %v1023 = vadd.f32 0.0, %v1022
        %v1024 = vpop.f32.mrb[0].mxu0
        %v1025 = vadd.f32 0.0, %v1024
        %v1026 = vpop.f32.mrb[0].mxu0
        %v1027 = vadd.f32 0.0, %v1026
        %1028 = vmatprep.mubr.bf16.mxu0 0
        %1029 = vmatmul.mubr.bf16.gmra.mrb[0].mxu0 %v855
        %v1030 = vpop.f32.mrb[0].mxu0
        %v1031 = vadd.f32 0.0, %v1030
        %v1032 = vpop.f32.mrb[0].mxu0
        %v1033 = vadd.f32 0.0, %v1032
        %v1034 = vpop.f32.mrb[0].mxu0
        %v1035 = vadd.f32 0.0, %v1034
        %v1036 = vpop.f32.mrb[0].mxu0
        %v1037 = vadd.f32 0.0, %v1036
        %1038 = vmatprep.mubr.bf16.mxu0 0
        %1039 = vmatmul.mubr.bf16.gmra.mrb[0].mxu0 %v856
        %v1040 = vpop.f32.mrb[0].mxu0
        %v1041 = vadd.f32 0.0, %v1040
        %v1042 = vpop.f32.mrb[0].mxu0
        %v1043 = vadd.f32 0.0, %v1042
        %v1044 = vpop.f32.mrb[0].mxu0
        %v1045 = vadd.f32 0.0, %v1044
        %v1046 = vpop.f32.mrb[0].mxu0
        %v1047 = vadd.f32 0.0, %v1046
        %1048 = vmatprep.mubr.bf16.mxu0 0
        %1049 = vmatmul.mubr.bf16.gmra.mrb[0].mxu0 %v857
        %v1050 = vpop.f32.mrb[0].mxu0
        %v1051 = vadd.f32 0.0, %v1050
        %v1052 = vpop.f32.mrb[0].mxu0
        %v1053 = vadd.f32 0.0, %v1052
        %v1054 = vpop.f32.mrb[0].mxu0
        %v1055 = vadd.f32 0.0, %v1054
        %v1056 = vpop.f32.mrb[0].mxu0
        %v1057 = vadd.f32 0.0, %v1056
        %1058 = vdwg.mxu0
        %v1059 = vadd.f32 %v754, %v981
        %v1060 = vadd.f32 %v755, %v983
        %v1061 = vadd.f32 %v756, %v985
        %v1062 = vadd.f32 %v757, %v987
        %v1063 = vadd.f32 %v758, %v991
        %v1064 = vadd.f32 %v759, %v993
        %v1065 = vadd.f32 %v760, %v995
        %v1066 = vadd.f32 %v761, %v997
        %v1067 = vadd.f32 %v762, %v1001
        %v1068 = vadd.f32 %v763, %v1003
        %v1069 = vadd.f32 %v764, %v1005
        %v1070 = vadd.f32 %v765, %v1007
        %v1071 = vadd.f32 %v766, %v1011
        %v1072 = vadd.f32 %v767, %v1013
        %v1073 = vadd.f32 %v768, %v1015
        %v1074 = vadd.f32 %v769, %v1017
        %v1075 = vadd.f32 %v770, %v1021
        %v1076 = vadd.f32 %v771, %v1023
        %v1077 = vadd.f32 %v772, %v1025
        %v1078 = vadd.f32 %v773, %v1027
        %v1079 = vadd.f32 %v774, %v1031
        %v1080 = vadd.f32 %v775, %v1033
        %v1081 = vadd.f32 %v776, %v1035
        %v1082 = vadd.f32 %v777, %v1037
        %v1083 = vadd.f32 %v778, %v1041
        %v1084 = vadd.f32 %v779, %v1043
        %v1085 = vadd.f32 %v780, %v1045
        %v1086 = vadd.f32 %v781, %v1047
        %v1087 = vadd.f32 %v782, %v1051
        %v1088 = vadd.f32 %v783, %v1053
        %v1089 = vadd.f32 %v784, %v1055
        %v1090 = vadd.f32 %v785, %v1057
        %1091 = vst [vmem:[#allocation2] sm:$0xff] %v1059
        %1092 = vst [vmem:[#allocation2 + $0x8] sm:$0xff] %v1060
        %1093 = vst [vmem:[#allocation2 + $0x10] sm:$0xff] %v1061
        %1094 = vst [vmem:[#allocation2 + $0x18] sm:$0xff] %v1062
        %1095 = vst [vmem:[#allocation2 + $0x20] sm:$0xff] %v1063
        %1096 = vst [vmem:[#allocation2 + $0x28] sm:$0xff] %v1064
        %1097 = vst [vmem:[#allocation2 + $0x30] sm:$0xff] %v1065
        %1098 = vst [vmem:[#allocation2 + $0x38] sm:$0xff] %v1066
        %1099 = vst [vmem:[#allocation2 + $0x40] sm:$0xff] %v1067
        %1100 = vst [vmem:[#allocation2 + $0x48] sm:$0xff] %v1068
        %1101 = vst [vmem:[#allocation2 + $0x50] sm:$0xff] %v1069
        %1102 = vst [vmem:[#allocation2 + $0x58] sm:$0xff] %v1070
        %1103 = vst [vmem:[#allocation2 + $0x60] sm:$0xff] %v1071
        %1104 = vst [vmem:[#allocation2 + $0x68] sm:$0xff] %v1072
        %1105 = vst [vmem:[#allocation2 + $0x70] sm:$0xff] %v1073
        %1106 = vst [vmem:[#allocation2 + $0x78] sm:$0xff] %v1074
        %1107 = vst [vmem:[#allocation2 + $0x80] sm:$0xff] %v1075
        %1108 = vst [vmem:[#allocation2 + $0x88] sm:$0xff] %v1076
        %1109 = vst [vmem:[#allocation2 + $0x90] sm:$0xff] %v1077
        %1110 = vst [vmem:[#allocation2 + $0x98] sm:$0xff] %v1078
        %1111 = vst [vmem:[#allocation2 + $0xa0] sm:$0xff] %v1079
        %1112 = vst [vmem:[#allocation2 + $0xa8] sm:$0xff] %v1080
        %1113 = vst [vmem:[#allocation2 + $0xb0] sm:$0xff] %v1081
        %1114 = vst [vmem:[#allocation2 + $0xb8] sm:$0xff] %v1082
        %1115 = vst [vmem:[#allocation2 + $0xc0] sm:$0xff] %v1083
        %1116 = vst [vmem:[#allocation2 + $0xc8] sm:$0xff] %v1084
        %1117 = vst [vmem:[#allocation2 + $0xd0] sm:$0xff] %v1085
        %1118 = vst [vmem:[#allocation2 + $0xd8] sm:$0xff] %v1086
        %1119 = vst [vmem:[#allocation2 + $0xe0] sm:$0xff] %v1087
        %1120 = vst [vmem:[#allocation2 + $0xe8] sm:$0xff] %v1088
        %1121 = vst [vmem:[#allocation2 + $0xf0] sm:$0xff] %v1089
        %1122 = vst [vmem:[#allocation2 + $0xf8] sm:$0xff] %v1090
        %v1123 = vld [vmem:[#allocation3] sm:$0xff]
        %v1124 = vld [vmem:[#allocation3 + $0x8] sm:$0xff]
        %v1125 = vld [vmem:[#allocation3 + $0x10] sm:$0xff]
        %v1126 = vld [vmem:[#allocation3 + $0x18] sm:$0xff]
        %v1127 = vld [vmem:[#allocation3 + $0x20] sm:$0xff]
        %v1128 = vld [vmem:[#allocation3 + $0x28] sm:$0xff]
        %v1129 = vld [vmem:[#allocation3 + $0x30] sm:$0xff]
        %v1130 = vld [vmem:[#allocation3 + $0x38] sm:$0xff]
        %v1131 = vld [vmem:[#allocation3 + $0x40] sm:$0xff]
        %v1132 = vld [vmem:[#allocation3 + $0x48] sm:$0xff]
        %v1133 = vld [vmem:[#allocation3 + $0x50] sm:$0xff]
        %v1134 = vld [vmem:[#allocation3 + $0x58] sm:$0xff]
        %v1135 = vld [vmem:[#allocation3 + $0x60] sm:$0xff]
        %v1136 = vld [vmem:[#allocation3 + $0x68] sm:$0xff]
        %v1137 = vld [vmem:[#allocation3 + $0x70] sm:$0xff]
        %v1138 = vld [vmem:[#allocation3 + $0x78] sm:$0xff]
        %v1139 = vld [vmem:[#allocation3 + $0x80] sm:$0xff]
        %v1140 = vld [vmem:[#allocation3 + $0x88] sm:$0xff]
        %v1141 = vld [vmem:[#allocation3 + $0x90] sm:$0xff]
        %v1142 = vld [vmem:[#allocation3 + $0x98] sm:$0xff]
        %v1143 = vld [vmem:[#allocation3 + $0xa0] sm:$0xff]
        %v1144 = vld [vmem:[#allocation3 + $0xa8] sm:$0xff]
        %v1145 = vld [vmem:[#allocation3 + $0xb0] sm:$0xff]
        %v1146 = vld [vmem:[#allocation3 + $0xb8] sm:$0xff]
        %v1147 = vld [vmem:[#allocation3 + $0xc0] sm:$0xff]
        %v1148 = vld [vmem:[#allocation3 + $0xc8] sm:$0xff]
        %v1149 = vld [vmem:[#allocation3 + $0xd0] sm:$0xff]
        %v1150 = vld [vmem:[#allocation3 + $0xd8] sm:$0xff]
        %v1151 = vld [vmem:[#allocation3 + $0xe0] sm:$0xff]
        %v1152 = vld [vmem:[#allocation3 + $0xe8] sm:$0xff]
        %v1153 = vld [vmem:[#allocation3 + $0xf0] sm:$0xff]
        %v1154 = vld [vmem:[#allocation3 + $0xf8] sm:$0xff]
        %v1155 = vld [vmem:[%s534] sm:$0xf]
        %v1156 = vld [vmem:[%s534 + $0x4] sm:$0xf]
        %v1157 = vld [vmem:[%s534 + $0x8] sm:$0xf]
        %v1158 = vld [vmem:[%s534 + $0xc] sm:$0xf]
        %v1159 = vld [vmem:[%s534 + $0x10] sm:$0xf]
        %v1160 = vld [vmem:[%s534 + $0x14] sm:$0xf]
        %v1161 = vld [vmem:[%s534 + $0x18] sm:$0xf]
        %v1162 = vld [vmem:[%s534 + $0x1c] sm:$0xf]
        %v1163 = vld [vmem:[%s534 + $0x20] sm:$0xf]
        %v1164 = vld [vmem:[%s534 + $0x24] sm:$0xf]
        %v1165 = vld [vmem:[%s534 + $0x28] sm:$0xf]
        %v1166 = vld [vmem:[%s534 + $0x2c] sm:$0xf]
        %v1167 = vld [vmem:[%s534 + $0x30] sm:$0xf]
        %v1168 = vld [vmem:[%s534 + $0x34] sm:$0xf]
        %v1169 = vld [vmem:[%s534 + $0x38] sm:$0xf]
        %v1170 = vld [vmem:[%s534 + $0x3c] sm:$0xf]
        %v1171 = vld [vmem:[%s561] sm:$0xff]
        %v1172 = vld [vmem:[%s561 + $0x8] sm:$0xff]
        %v1173 = vld [vmem:[%s561 + $0x10] sm:$0xff]
        %v1174 = vld [vmem:[%s561 + $0x18] sm:$0xff]
        %v1175 = vld [vmem:[%s561 + $0x20] sm:$0xff]
        %v1176 = vld [vmem:[%s561 + $0x28] sm:$0xff]
        %v1177 = vld [vmem:[%s561 + $0x30] sm:$0xff]
        %v1178 = vld [vmem:[%s561 + $0x38] sm:$0xff]
        %v1179 = vld [vmem:[%s561 + $0x40] sm:$0xff]
        %v1180 = vld [vmem:[%s561 + $0x48] sm:$0xff]
        %v1181 = vld [vmem:[%s561 + $0x50] sm:$0xff]
        %v1182 = vld [vmem:[%s561 + $0x58] sm:$0xff]
        %v1183 = vld [vmem:[%s561 + $0x60] sm:$0xff]
        %v1184 = vld [vmem:[%s561 + $0x68] sm:$0xff]
        %v1185 = vld [vmem:[%s561 + $0x70] sm:$0xff]
        %v1186 = vld [vmem:[%s561 + $0x78] sm:$0xff]
        %v1203 = vunpack.c.l.b16 %v1155
        %v1204 = vunpack.c.l.b16 %v1156
        %v1205 = vunpack.c.l.b16 %v1157
        %v1206 = vunpack.c.l.b16 %v1158
        %v1207 = vunpack.c.l.b16 %v1159
        %v1208 = vunpack.c.l.b16 %v1160
        %v1209 = vunpack.c.l.b16 %v1161
        %v1210 = vunpack.c.l.b16 %v1162
        %v1211 = vunpack.c.l.b16 %v1163
        %v1212 = vunpack.c.l.b16 %v1164
        %v1213 = vunpack.c.l.b16 %v1165
        %v1214 = vunpack.c.l.b16 %v1166
        %v1215 = vunpack.c.l.b16 %v1167
        %v1216 = vunpack.c.l.b16 %v1168
        %v1217 = vunpack.c.l.b16 %v1169
        %v1218 = vunpack.c.l.b16 %v1170
        %v1219 = vpack.c.b16 %v1204, %v1203
        %v1220 = vpack.c.b16 %v1206, %v1205
        %v1221 = vpack.c.b16 %v1208, %v1207
        %v1222 = vpack.c.b16 %v1210, %v1209
        %v1223 = vpack.c.b16 %v1212, %v1211
        %v1224 = vpack.c.b16 %v1214, %v1213
        %v1225 = vpack.c.b16 %v1216, %v1215
        %v1226 = vpack.c.b16 %v1218, %v1217
        %v1251 = vunpack.c.l.b16 %v1171
        %v1252 = vunpack.c.h.b16 %v1171
        %v1253 = vunpack.c.l.b16 %v1172
        %v1254 = vunpack.c.h.b16 %v1172
        %v1255 = vunpack.c.l.b16 %v1173
        %v1256 = vunpack.c.h.b16 %v1173
        %v1257 = vunpack.c.l.b16 %v1174
        %v1258 = vunpack.c.h.b16 %v1174
        %v1259 = vunpack.c.l.b16 %v1175
        %v1260 = vunpack.c.h.b16 %v1175
        %v1261 = vunpack.c.l.b16 %v1176
        %v1262 = vunpack.c.h.b16 %v1176
        %v1263 = vunpack.c.l.b16 %v1177
        %v1264 = vunpack.c.h.b16 %v1177
        %v1265 = vunpack.c.l.b16 %v1178
        %v1266 = vunpack.c.h.b16 %v1178
        %v1267 = vunpack.c.l.b16 %v1179
        %v1268 = vunpack.c.h.b16 %v1179
        %v1269 = vunpack.c.l.b16 %v1180
        %v1270 = vunpack.c.h.b16 %v1180
        %v1271 = vunpack.c.l.b16 %v1181
        %v1272 = vunpack.c.h.b16 %v1181
        %v1273 = vunpack.c.l.b16 %v1182
        %v1274 = vunpack.c.h.b16 %v1182
        %v1275 = vunpack.c.l.b16 %v1183
        %v1276 = vunpack.c.h.b16 %v1183
        %v1277 = vunpack.c.l.b16 %v1184
        %v1278 = vunpack.c.h.b16 %v1184
        %v1279 = vunpack.c.l.b16 %v1185
        %v1280 = vunpack.c.h.b16 %v1185
        %v1281 = vunpack.c.l.b16 %v1186
        %v1282 = vunpack.c.h.b16 %v1186
        %v1283 = vpack.c.b16 %v1253, %v1251
        %v1284 = vpack.c.b16 %v1254, %v1252
        %v1285 = vpack.c.b16 %v1257, %v1255
        %v1286 = vpack.c.b16 %v1258, %v1256
        %v1287 = vpack.c.b16 %v1261, %v1259
        %v1288 = vpack.c.b16 %v1262, %v1260
        %v1289 = vpack.c.b16 %v1265, %v1263
        %v1290 = vpack.c.b16 %v1266, %v1264
        %v1291 = vpack.c.b16 %v1269, %v1267
        %v1292 = vpack.c.b16 %v1270, %v1268
        %v1293 = vpack.c.b16 %v1273, %v1271
        %v1294 = vpack.c.b16 %v1274, %v1272
        %v1295 = vpack.c.b16 %v1277, %v1275
        %v1296 = vpack.c.b16 %v1278, %v1276
        %v1297 = vpack.c.b16 %v1281, %v1279
        %v1298 = vpack.c.b16 %v1282, %v1280
        %1315 = vmatprep.subr.bf16.mxu0 %v1284
        %1316 = vmatpush1.bf16.msra.mxu0 %v1283
        %1317 = vmatprep.subr.bf16.mxu0 %v1286
        %1318 = vmatpush1.bf16.msra.mxu0 %v1285
        %1319 = vmatprep.subr.bf16.mxu0 %v1288
        %1320 = vmatpush1.bf16.msra.mxu0 %v1287
        %1321 = vmatprep.subr.bf16.mxu0 %v1290
        %1322 = vmatpush1.bf16.msra.mxu0 %v1289
        %1323 = vmatprep.subr.bf16.mxu0 %v1292
        %1324 = vmatpush1.bf16.msra.mxu0 %v1291
        %1325 = vmatprep.subr.bf16.mxu0 %v1294
        %1326 = vmatpush1.bf16.msra.mxu0 %v1293
        %1327 = vmatprep.subr.bf16.mxu0 %v1296
        %1328 = vmatpush1.bf16.msra.mxu0 %v1295
        %1329 = vmatprep.subr.bf16.mxu0 %v1298
        %1330 = vmatpush1.bf16.msra.mxu0 %v1297
        %1331 = vmatprep.subr.bf16.mxu0 0
        %1332 = vmatpush1.bf16.msra.mxu0 0
        %1333 = vmatprep.subr.bf16.mxu0 0
        %1334 = vmatpush1.bf16.msra.mxu0 0
        %1335 = vmatprep.subr.bf16.mxu0 0
        %1336 = vmatpush1.bf16.msra.mxu0 0
        %1337 = vmatprep.subr.bf16.mxu0 0
        %1338 = vmatpush1.bf16.msra.mxu0 0
        %1339 = vmatprep.subr.bf16.mxu0 0
        %1340 = vmatpush1.bf16.msra.mxu0 0
        %1341 = vmatprep.subr.bf16.mxu0 0
        %1342 = vmatpush1.bf16.msra.mxu0 0
        %1343 = vmatprep.subr.bf16.mxu0 0
        %1344 = vmatpush1.bf16.msra.mxu0 0
        %1345 = vmatprep.subr.bf16.mxu0 0
        %1346 = vmatpush1.bf16.msra.mxu0 0
        %1347 = vmatprep.mubr.bf16.mxu0 0
        %1348 = vmatmul.mubr.bf16.gmra.mrb[0].mxu0 %v1219
        %v1349 = vpop.f32.mrb[0].mxu0
        %v1350 = vadd.f32 0.0, %v1349
        %v1351 = vpop.f32.mrb[0].mxu0
        %v1352 = vadd.f32 0.0, %v1351
        %v1353 = vpop.f32.mrb[0].mxu0
        %v1354 = vadd.f32 0.0, %v1353
        %v1355 = vpop.f32.mrb[0].mxu0
        %v1356 = vadd.f32 0.0, %v1355
        %1357 = vmatprep.mubr.bf16.mxu0 0
        %1358 = vmatmul.mubr.bf16.gmra.mrb[0].mxu0 %v1220
        %v1359 = vpop.f32.mrb[0].mxu0
        %v1360 = vadd.f32 0.0, %v1359
        %v1361 = vpop.f32.mrb[0].mxu0
        %v1362 = vadd.f32 0.0, %v1361
        %v1363 = vpop.f32.mrb[0].mxu0
        %v1364 = vadd.f32 0.0, %v1363
        %v1365 = vpop.f32.mrb[0].mxu0
        %v1366 = vadd.f32 0.0, %v1365
        %1367 = vmatprep.mubr.bf16.mxu0 0
        %1368 = vmatmul.mubr.bf16.gmra.mrb[0].mxu0 %v1221
        %v1369 = vpop.f32.mrb[0].mxu0
        %v1370 = vadd.f32 0.0, %v1369
        %v1371 = vpop.f32.mrb[0].mxu0
        %v1372 = vadd.f32 0.0, %v1371
        %v1373 = vpop.f32.mrb[0].mxu0
        %v1374 = vadd.f32 0.0, %v1373
        %v1375 = vpop.f32.mrb[0].mxu0
        %v1376 = vadd.f32 0.0, %v1375
        %1377 = vmatprep.mubr.bf16.mxu0 0
        %1378 = vmatmul.mubr.bf16.gmra.mrb[0].mxu0 %v1222
        %v1379 = vpop.f32.mrb[0].mxu0
        %v1380 = vadd.f32 0.0, %v1379
        %v1381 = vpop.f32.mrb[0].mxu0
        %v1382 = vadd.f32 0.0, %v1381
        %v1383 = vpop.f32.mrb[0].mxu0
        %v1384 = vadd.f32 0.0, %v1383
        %v1385 = vpop.f32.mrb[0].mxu0
        %v1386 = vadd.f32 0.0, %v1385
        %1387 = vmatprep.mubr.bf16.mxu0 0
        %1388 = vmatmul.mubr.bf16.gmra.mrb[0].mxu0 %v1223
        %v1389 = vpop.f32.mrb[0].mxu0
        %v1390 = vadd.f32 0.0, %v1389
        %v1391 = vpop.f32.mrb[0].mxu0
        %v1392 = vadd.f32 0.0, %v1391
        %v1393 = vpop.f32.mrb[0].mxu0
        %v1394 = vadd.f32 0.0, %v1393
        %v1395 = vpop.f32.mrb[0].mxu0
        %v1396 = vadd.f32 0.0, %v1395
        %1397 = vmatprep.mubr.bf16.mxu0 0
        %1398 = vmatmul.mubr.bf16.gmra.mrb[0].mxu0 %v1224
        %v1399 = vpop.f32.mrb[0].mxu0
        %v1400 = vadd.f32 0.0, %v1399
        %v1401 = vpop.f32.mrb[0].mxu0
        %v1402 = vadd.f32 0.0, %v1401
        %v1403 = vpop.f32.mrb[0].mxu0
        %v1404 = vadd.f32 0.0, %v1403
        %v1405 = vpop.f32.mrb[0].mxu0
        %v1406 = vadd.f32 0.0, %v1405
        %1407 = vmatprep.mubr.bf16.mxu0 0
        %1408 = vmatmul.mubr.bf16.gmra.mrb[0].mxu0 %v1225
        %v1409 = vpop.f32.mrb[0].mxu0
        %v1410 = vadd.f32 0.0, %v1409
        %v1411 = vpop.f32.mrb[0].mxu0
        %v1412 = vadd.f32 0.0, %v1411
        %v1413 = vpop.f32.mrb[0].mxu0
        %v1414 = vadd.f32 0.0, %v1413
        %v1415 = vpop.f32.mrb[0].mxu0
        %v1416 = vadd.f32 0.0, %v1415
        %1417 = vmatprep.mubr.bf16.mxu0 0
        %1418 = vmatmul.mubr.bf16.gmra.mrb[0].mxu0 %v1226
        %v1419 = vpop.f32.mrb[0].mxu0
        %v1420 = vadd.f32 0.0, %v1419
        %v1421 = vpop.f32.mrb[0].mxu0
        %v1422 = vadd.f32 0.0, %v1421
        %v1423 = vpop.f32.mrb[0].mxu0
        %v1424 = vadd.f32 0.0, %v1423
        %v1425 = vpop.f32.mrb[0].mxu0
        %v1426 = vadd.f32 0.0, %v1425
        %1427 = vdwg.mxu0
        %v1428 = vadd.f32 %v1123, %v1350
        %v1429 = vadd.f32 %v1124, %v1352
        %v1430 = vadd.f32 %v1125, %v1354
        %v1431 = vadd.f32 %v1126, %v1356
        %v1432 = vadd.f32 %v1127, %v1360
        %v1433 = vadd.f32 %v1128, %v1362
        %v1434 = vadd.f32 %v1129, %v1364
        %v1435 = vadd.f32 %v1130, %v1366
        %v1436 = vadd.f32 %v1131, %v1370
        %v1437 = vadd.f32 %v1132, %v1372
        %v1438 = vadd.f32 %v1133, %v1374
        %v1439 = vadd.f32 %v1134, %v1376
        %v1440 = vadd.f32 %v1135, %v1380
        %v1441 = vadd.f32 %v1136, %v1382
        %v1442 = vadd.f32 %v1137, %v1384
        %v1443 = vadd.f32 %v1138, %v1386
        %v1444 = vadd.f32 %v1139, %v1390
        %v1445 = vadd.f32 %v1140, %v1392
        %v1446 = vadd.f32 %v1141, %v1394
        %v1447 = vadd.f32 %v1142, %v1396
        %v1448 = vadd.f32 %v1143, %v1400
        %v1449 = vadd.f32 %v1144, %v1402
        %v1450 = vadd.f32 %v1145, %v1404
        %v1451 = vadd.f32 %v1146, %v1406
        %v1452 = vadd.f32 %v1147, %v1410
        %v1453 = vadd.f32 %v1148, %v1412
        %v1454 = vadd.f32 %v1149, %v1414
        %v1455 = vadd.f32 %v1150, %v1416
        %v1456 = vadd.f32 %v1151, %v1420
        %v1457 = vadd.f32 %v1152, %v1422
        %v1458 = vadd.f32 %v1153, %v1424
        %v1459 = vadd.f32 %v1154, %v1426
        %1460 = vst [vmem:[#allocation3] sm:$0xff] %v1428
        %1461 = vst [vmem:[#allocation3 + $0x8] sm:$0xff] %v1429
        %1462 = vst [vmem:[#allocation3 + $0x10] sm:$0xff] %v1430
        %1463 = vst [vmem:[#allocation3 + $0x18] sm:$0xff] %v1431
        %1464 = vst [vmem:[#allocation3 + $0x20] sm:$0xff] %v1432
        %1465 = vst [vmem:[#allocation3 + $0x28] sm:$0xff] %v1433
        %1466 = vst [vmem:[#allocation3 + $0x30] sm:$0xff] %v1434
        %1467 = vst [vmem:[#allocation3 + $0x38] sm:$0xff] %v1435
        %1468 = vst [vmem:[#allocation3 + $0x40] sm:$0xff] %v1436
        %1469 = vst [vmem:[#allocation3 + $0x48] sm:$0xff] %v1437
        %1470 = vst [vmem:[#allocation3 + $0x50] sm:$0xff] %v1438
        %1471 = vst [vmem:[#allocation3 + $0x58] sm:$0xff] %v1439
        %1472 = vst [vmem:[#allocation3 + $0x60] sm:$0xff] %v1440
        %1473 = vst [vmem:[#allocation3 + $0x68] sm:$0xff] %v1441
        %1474 = vst [vmem:[#allocation3 + $0x70] sm:$0xff] %v1442
        %1475 = vst [vmem:[#allocation3 + $0x78] sm:$0xff] %v1443
        %1476 = vst [vmem:[#allocation3 + $0x80] sm:$0xff] %v1444
        %1477 = vst [vmem:[#allocation3 + $0x88] sm:$0xff] %v1445
        %1478 = vst [vmem:[#allocation3 + $0x90] sm:$0xff] %v1446
        %1479 = vst [vmem:[#allocation3 + $0x98] sm:$0xff] %v1447
        %1480 = vst [vmem:[#allocation3 + $0xa0] sm:$0xff] %v1448
        %1481 = vst [vmem:[#allocation3 + $0xa8] sm:$0xff] %v1449
        %1482 = vst [vmem:[#allocation3 + $0xb0] sm:$0xff] %v1450
        %1483 = vst [vmem:[#allocation3 + $0xb8] sm:$0xff] %v1451
        %1484 = vst [vmem:[#allocation3 + $0xc0] sm:$0xff] %v1452
        %1485 = vst [vmem:[#allocation3 + $0xc8] sm:$0xff] %v1453
        %1486 = vst [vmem:[#allocation3 + $0xd0] sm:$0xff] %v1454
        %1487 = vst [vmem:[#allocation3 + $0xd8] sm:$0xff] %v1455
        %1488 = vst [vmem:[#allocation3 + $0xe0] sm:$0xff] %v1456
        %1489 = vst [vmem:[#allocation3 + $0xe8] sm:$0xff] %v1457
        %1490 = vst [vmem:[#allocation3 + $0xf0] sm:$0xff] %v1458
        %1491 = vst [vmem:[#allocation3 + $0xf8] sm:$0xff] %v1459
        %v1492 = vld [vmem:[#allocation4] sm:$0xff]
        %v1493 = vld [vmem:[#allocation4 + $0x8] sm:$0xff]
        %v1494 = vld [vmem:[#allocation4 + $0x10] sm:$0xff]
        %v1495 = vld [vmem:[#allocation4 + $0x18] sm:$0xff]
        %v1496 = vld [vmem:[#allocation4 + $0x20] sm:$0xff]
        %v1497 = vld [vmem:[#allocation4 + $0x28] sm:$0xff]
        %v1498 = vld [vmem:[#allocation4 + $0x30] sm:$0xff]
        %v1499 = vld [vmem:[#allocation4 + $0x38] sm:$0xff]
        %v1500 = vld [vmem:[#allocation4 + $0x40] sm:$0xff]
        %v1501 = vld [vmem:[#allocation4 + $0x48] sm:$0xff]
        %v1502 = vld [vmem:[#allocation4 + $0x50] sm:$0xff]
        %v1503 = vld [vmem:[#allocation4 + $0x58] sm:$0xff]
        %v1504 = vld [vmem:[#allocation4 + $0x60] sm:$0xff]
        %v1505 = vld [vmem:[#allocation4 + $0x68] sm:$0xff]
        %v1506 = vld [vmem:[#allocation4 + $0x70] sm:$0xff]
        %v1507 = vld [vmem:[#allocation4 + $0x78] sm:$0xff]
        %v1508 = vld [vmem:[#allocation4 + $0x80] sm:$0xff]
        %v1509 = vld [vmem:[#allocation4 + $0x88] sm:$0xff]
        %v1510 = vld [vmem:[#allocation4 + $0x90] sm:$0xff]
        %v1511 = vld [vmem:[#allocation4 + $0x98] sm:$0xff]
        %v1512 = vld [vmem:[#allocation4 + $0xa0] sm:$0xff]
        %v1513 = vld [vmem:[#allocation4 + $0xa8] sm:$0xff]
        %v1514 = vld [vmem:[#allocation4 + $0xb0] sm:$0xff]
        %v1515 = vld [vmem:[#allocation4 + $0xb8] sm:$0xff]
        %v1516 = vld [vmem:[#allocation4 + $0xc0] sm:$0xff]
        %v1517 = vld [vmem:[#allocation4 + $0xc8] sm:$0xff]
        %v1518 = vld [vmem:[#allocation4 + $0xd0] sm:$0xff]
        %v1519 = vld [vmem:[#allocation4 + $0xd8] sm:$0xff]
        %v1520 = vld [vmem:[#allocation4 + $0xe0] sm:$0xff]
        %v1521 = vld [vmem:[#allocation4 + $0xe8] sm:$0xff]
        %v1522 = vld [vmem:[#allocation4 + $0xf0] sm:$0xff]
        %v1523 = vld [vmem:[#allocation4 + $0xf8] sm:$0xff]
        %v1524 = vld [vmem:[%s543] sm:$0xf]
        %v1525 = vld [vmem:[%s543 + $0x4] sm:$0xf]
        %v1526 = vld [vmem:[%s543 + $0x8] sm:$0xf]
        %v1527 = vld [vmem:[%s543 + $0xc] sm:$0xf]
        %v1528 = vld [vmem:[%s543 + $0x10] sm:$0xf]
        %v1529 = vld [vmem:[%s543 + $0x14] sm:$0xf]
        %v1530 = vld [vmem:[%s543 + $0x18] sm:$0xf]
        %v1531 = vld [vmem:[%s543 + $0x1c] sm:$0xf]
        %v1532 = vld [vmem:[%s543 + $0x20] sm:$0xf]
        %v1533 = vld [vmem:[%s543 + $0x24] sm:$0xf]
        %v1534 = vld [vmem:[%s543 + $0x28] sm:$0xf]
        %v1535 = vld [vmem:[%s543 + $0x2c] sm:$0xf]
        %v1536 = vld [vmem:[%s543 + $0x30] sm:$0xf]
        %v1537 = vld [vmem:[%s543 + $0x34] sm:$0xf]
        %v1538 = vld [vmem:[%s543 + $0x38] sm:$0xf]
        %v1539 = vld [vmem:[%s543 + $0x3c] sm:$0xf]
        %v1540 = vld [vmem:[%s570] sm:$0xff]
        %v1541 = vld [vmem:[%s570 + $0x8] sm:$0xff]
        %v1542 = vld [vmem:[%s570 + $0x10] sm:$0xff]
        %v1543 = vld [vmem:[%s570 + $0x18] sm:$0xff]
        %v1544 = vld [vmem:[%s570 + $0x20] sm:$0xff]
        %v1545 = vld [vmem:[%s570 + $0x28] sm:$0xff]
        %v1546 = vld [vmem:[%s570 + $0x30] sm:$0xff]
        %v1547 = vld [vmem:[%s570 + $0x38] sm:$0xff]
        %v1548 = vld [vmem:[%s570 + $0x40] sm:$0xff]
        %v1549 = vld [vmem:[%s570 + $0x48] sm:$0xff]
        %v1550 = vld [vmem:[%s570 + $0x50] sm:$0xff]
        %v1551 = vld [vmem:[%s570 + $0x58] sm:$0xff]
        %v1552 = vld [vmem:[%s570 + $0x60] sm:$0xff]
        %v1553 = vld [vmem:[%s570 + $0x68] sm:$0xff]
        %v1554 = vld [vmem:[%s570 + $0x70] sm:$0xff]
        %v1555 = vld [vmem:[%s570 + $0x78] sm:$0xff]
        %v1572 = vunpack.c.l.b16 %v1524
        %v1573 = vunpack.c.l.b16 %v1525
        %v1574 = vunpack.c.l.b16 %v1526
        %v1575 = vunpack.c.l.b16 %v1527
        %v1576 = vunpack.c.l.b16 %v1528
        %v1577 = vunpack.c.l.b16 %v1529
        %v1578 = vunpack.c.l.b16 %v1530
        %v1579 = vunpack.c.l.b16 %v1531
        %v1580 = vunpack.c.l.b16 %v1532
        %v1581 = vunpack.c.l.b16 %v1533
        %v1582 = vunpack.c.l.b16 %v1534
        %v1583 = vunpack.c.l.b16 %v1535
        %v1584 = vunpack.c.l.b16 %v1536
        %v1585 = vunpack.c.l.b16 %v1537
        %v1586 = vunpack.c.l.b16 %v1538
        %v1587 = vunpack.c.l.b16 %v1539
        %v1588 = vpack.c.b16 %v1573, %v1572
        %v1589 = vpack.c.b16 %v1575, %v1574
        %v1590 = vpack.c.b16 %v1577, %v1576
        %v1591 = vpack.c.b16 %v1579, %v1578
        %v1592 = vpack.c.b16 %v1581, %v1580
        %v1593 = vpack.c.b16 %v1583, %v1582
        %v1594 = vpack.c.b16 %v1585, %v1584
        %v1595 = vpack.c.b16 %v1587, %v1586
        %v1620 = vunpack.c.l.b16 %v1540
        %v1621 = vunpack.c.h.b16 %v1540
        %v1622 = vunpack.c.l.b16 %v1541
        %v1623 = vunpack.c.h.b16 %v1541
        %v1624 = vunpack.c.l.b16 %v1542
        %v1625 = vunpack.c.h.b16 %v1542
        %v1626 = vunpack.c.l.b16 %v1543
        %v1627 = vunpack.c.h.b16 %v1543
        %v1628 = vunpack.c.l.b16 %v1544
        %v1629 = vunpack.c.h.b16 %v1544
        %v1630 = vunpack.c.l.b16 %v1545
        %v1631 = vunpack.c.h.b16 %v1545
        %v1632 = vunpack.c.l.b16 %v1546
        %v1633 = vunpack.c.h.b16 %v1546
        %v1634 = vunpack.c.l.b16 %v1547
        %v1635 = vunpack.c.h.b16 %v1547
        %v1636 = vunpack.c.l.b16 %v1548
        %v1637 = vunpack.c.h.b16 %v1548
        %v1638 = vunpack.c.l.b16 %v1549
        %v1639 = vunpack.c.h.b16 %v1549
        %v1640 = vunpack.c.l.b16 %v1550
        %v1641 = vunpack.c.h.b16 %v1550
        %v1642 = vunpack.c.l.b16 %v1551
        %v1643 = vunpack.c.h.b16 %v1551
        %v1644 = vunpack.c.l.b16 %v1552
        %v1645 = vunpack.c.h.b16 %v1552
        %v1646 = vunpack.c.l.b16 %v1553
        %v1647 = vunpack.c.h.b16 %v1553
        %v1648 = vunpack.c.l.b16 %v1554
        %v1649 = vunpack.c.h.b16 %v1554
        %v1650 = vunpack.c.l.b16 %v1555
        %v1651 = vunpack.c.h.b16 %v1555
        %v1652 = vpack.c.b16 %v1622, %v1620
        %v1653 = vpack.c.b16 %v1623, %v1621
        %v1654 = vpack.c.b16 %v1626, %v1624
        %v1655 = vpack.c.b16 %v1627, %v1625
        %v1656 = vpack.c.b16 %v1630, %v1628
        %v1657 = vpack.c.b16 %v1631, %v1629
        %v1658 = vpack.c.b16 %v1634, %v1632
        %v1659 = vpack.c.b16 %v1635, %v1633
        %v1660 = vpack.c.b16 %v1638, %v1636
        %v1661 = vpack.c.b16 %v1639, %v1637
        %v1662 = vpack.c.b16 %v1642, %v1640
        %v1663 = vpack.c.b16 %v1643, %v1641
        %v1664 = vpack.c.b16 %v1646, %v1644
        %v1665 = vpack.c.b16 %v1647, %v1645
        %v1666 = vpack.c.b16 %v1650, %v1648
        %v1667 = vpack.c.b16 %v1651, %v1649
        %1684 = vmatprep.subr.bf16.mxu0 %v1653
        %1685 = vmatpush1.bf16.msra.mxu0 %v1652
        %1686 = vmatprep.subr.bf16.mxu0 %v1655
        %1687 = vmatpush1.bf16.msra.mxu0 %v1654
        %1688 = vmatprep.subr.bf16.mxu0 %v1657
        %1689 = vmatpush1.bf16.msra.mxu0 %v1656
        %1690 = vmatprep.subr.bf16.mxu0 %v1659
        %1691 = vmatpush1.bf16.msra.mxu0 %v1658
        %1692 = vmatprep.subr.bf16.mxu0 %v1661
        %1693 = vmatpush1.bf16.msra.mxu0 %v1660
        %1694 = vmatprep.subr.bf16.mxu0 %v1663
        %1695 = vmatpush1.bf16.msra.mxu0 %v1662
        %1696 = vmatprep.subr.bf16.mxu0 %v1665
        %1697 = vmatpush1.bf16.msra.mxu0 %v1664
        %1698 = vmatprep.subr.bf16.mxu0 %v1667
        %1699 = vmatpush1.bf16.msra.mxu0 %v1666
        %1700 = vmatprep.subr.bf16.mxu0 0
        %1701 = vmatpush1.bf16.msra.mxu0 0
        %1702 = vmatprep.subr.bf16.mxu0 0
        %1703 = vmatpush1.bf16.msra.mxu0 0
        %1704 = vmatprep.subr.bf16.mxu0 0
        %1705 = vmatpush1.bf16.msra.mxu0 0
        %1706 = vmatprep.subr.bf16.mxu0 0
        %1707 = vmatpush1.bf16.msra.mxu0 0
        %1708 = vmatprep.subr.bf16.mxu0 0
        %1709 = vmatpush1.bf16.msra.mxu0 0
        %1710 = vmatprep.subr.bf16.mxu0 0
        %1711 = vmatpush1.bf16.msra.mxu0 0
        %1712 = vmatprep.subr.bf16.mxu0 0
        %1713 = vmatpush1.bf16.msra.mxu0 0
        %1714 = vmatprep.subr.bf16.mxu0 0
        %1715 = vmatpush1.bf16.msra.mxu0 0
        %1716 = vmatprep.mubr.bf16.mxu0 0
        %1717 = vmatmul.mubr.bf16.gmra.mrb[0].mxu0 %v1588
        %v1718 = vpop.f32.mrb[0].mxu0
        %v1719 = vadd.f32 0.0, %v1718
        %v1720 = vpop.f32.mrb[0].mxu0
        %v1721 = vadd.f32 0.0, %v1720
        %v1722 = vpop.f32.mrb[0].mxu0
        %v1723 = vadd.f32 0.0, %v1722
        %v1724 = vpop.f32.mrb[0].mxu0
        %v1725 = vadd.f32 0.0, %v1724
        %1726 = vmatprep.mubr.bf16.mxu0 0
        %1727 = vmatmul.mubr.bf16.gmra.mrb[0].mxu0 %v1589
        %v1728 = vpop.f32.mrb[0].mxu0
        %v1729 = vadd.f32 0.0, %v1728
        %v1730 = vpop.f32.mrb[0].mxu0
        %v1731 = vadd.f32 0.0, %v1730
        %v1732 = vpop.f32.mrb[0].mxu0
        %v1733 = vadd.f32 0.0, %v1732
        %v1734 = vpop.f32.mrb[0].mxu0
        %v1735 = vadd.f32 0.0, %v1734
        %1736 = vmatprep.mubr.bf16.mxu0 0
        %1737 = vmatmul.mubr.bf16.gmra.mrb[0].mxu0 %v1590
        %v1738 = vpop.f32.mrb[0].mxu0
        %v1739 = vadd.f32 0.0, %v1738
        %v1740 = vpop.f32.mrb[0].mxu0
        %v1741 = vadd.f32 0.0, %v1740
        %v1742 = vpop.f32.mrb[0].mxu0
        %v1743 = vadd.f32 0.0, %v1742
        %v1744 = vpop.f32.mrb[0].mxu0
        %v1745 = vadd.f32 0.0, %v1744
        %1746 = vmatprep.mubr.bf16.mxu0 0
        %1747 = vmatmul.mubr.bf16.gmra.mrb[0].mxu0 %v1591
        %v1748 = vpop.f32.mrb[0].mxu0
        %v1749 = vadd.f32 0.0, %v1748
        %v1750 = vpop.f32.mrb[0].mxu0
        %v1751 = vadd.f32 0.0, %v1750
        %v1752 = vpop.f32.mrb[0].mxu0
        %v1753 = vadd.f32 0.0, %v1752
        %v1754 = vpop.f32.mrb[0].mxu0
        %v1755 = vadd.f32 0.0, %v1754
        %1756 = vmatprep.mubr.bf16.mxu0 0
        %1757 = vmatmul.mubr.bf16.gmra.mrb[0].mxu0 %v1592
        %v1758 = vpop.f32.mrb[0].mxu0
        %v1759 = vadd.f32 0.0, %v1758
        %v1760 = vpop.f32.mrb[0].mxu0
        %v1761 = vadd.f32 0.0, %v1760
        %v1762 = vpop.f32.mrb[0].mxu0
        %v1763 = vadd.f32 0.0, %v1762
        %v1764 = vpop.f32.mrb[0].mxu0
        %v1765 = vadd.f32 0.0, %v1764
        %1766 = vmatprep.mubr.bf16.mxu0 0
        %1767 = vmatmul.mubr.bf16.gmra.mrb[0].mxu0 %v1593
        %v1768 = vpop.f32.mrb[0].mxu0
        %v1769 = vadd.f32 0.0, %v1768
        %v1770 = vpop.f32.mrb[0].mxu0
        %v1771 = vadd.f32 0.0, %v1770
        %v1772 = vpop.f32.mrb[0].mxu0
        %v1773 = vadd.f32 0.0, %v1772
        %v1774 = vpop.f32.mrb[0].mxu0
        %v1775 = vadd.f32 0.0, %v1774
        %1776 = vmatprep.mubr.bf16.mxu0 0
        %1777 = vmatmul.mubr.bf16.gmra.mrb[0].mxu0 %v1594
        %v1778 = vpop.f32.mrb[0].mxu0
        %v1779 = vadd.f32 0.0, %v1778
        %v1780 = vpop.f32.mrb[0].mxu0
        %v1781 = vadd.f32 0.0, %v1780
        %v1782 = vpop.f32.mrb[0].mxu0
        %v1783 = vadd.f32 0.0, %v1782
        %v1784 = vpop.f32.mrb[0].mxu0
        %v1785 = vadd.f32 0.0, %v1784
        %1786 = vmatprep.mubr.bf16.mxu0 0
        %1787 = vmatmul.mubr.bf16.gmra.mrb[0].mxu0 %v1595
        %v1788 = vpop.f32.mrb[0].mxu0
        %v1789 = vadd.f32 0.0, %v1788
        %v1790 = vpop.f32.mrb[0].mxu0
        %v1791 = vadd.f32 0.0, %v1790
        %v1792 = vpop.f32.mrb[0].mxu0
        %v1793 = vadd.f32 0.0, %v1792
        %v1794 = vpop.f32.mrb[0].mxu0
        %v1795 = vadd.f32 0.0, %v1794
        %1796 = vdwg.mxu0
        %v1797 = vadd.f32 %v1492, %v1719
        %v1798 = vadd.f32 %v1493, %v1721
        %v1799 = vadd.f32 %v1494, %v1723
        %v1800 = vadd.f32 %v1495, %v1725
        %v1801 = vadd.f32 %v1496, %v1729
        %v1802 = vadd.f32 %v1497, %v1731
        %v1803 = vadd.f32 %v1498, %v1733
        %v1804 = vadd.f32 %v1499, %v1735
        %v1805 = vadd.f32 %v1500, %v1739
        %v1806 = vadd.f32 %v1501, %v1741
        %v1807 = vadd.f32 %v1502, %v1743
        %v1808 = vadd.f32 %v1503, %v1745
        %v1809 = vadd.f32 %v1504, %v1749
        %v1810 = vadd.f32 %v1505, %v1751
        %v1811 = vadd.f32 %v1506, %v1753
        %v1812 = vadd.f32 %v1507, %v1755
        %v1813 = vadd.f32 %v1508, %v1759
        %v1814 = vadd.f32 %v1509, %v1761
        %v1815 = vadd.f32 %v1510, %v1763
        %v1816 = vadd.f32 %v1511, %v1765
        %v1817 = vadd.f32 %v1512, %v1769
        %v1818 = vadd.f32 %v1513, %v1771
        %v1819 = vadd.f32 %v1514, %v1773
        %v1820 = vadd.f32 %v1515, %v1775
        %v1821 = vadd.f32 %v1516, %v1779
        %v1822 = vadd.f32 %v1517, %v1781
        %v1823 = vadd.f32 %v1518, %v1783
        %v1824 = vadd.f32 %v1519, %v1785
        %v1825 = vadd.f32 %v1520, %v1789
        %v1826 = vadd.f32 %v1521, %v1791
        %v1827 = vadd.f32 %v1522, %v1793
        %v1828 = vadd.f32 %v1523, %v1795
        %1829 = vst [vmem:[#allocation4] sm:$0xff] %v1797
        %1830 = vst [vmem:[#allocation4 + $0x8] sm:$0xff] %v1798
        %1831 = vst [vmem:[#allocation4 + $0x10] sm:$0xff] %v1799
        %1832 = vst [vmem:[#allocation4 + $0x18] sm:$0xff] %v1800
        %1833 = vst [vmem:[#allocation4 + $0x20] sm:$0xff] %v1801
        %1834 = vst [vmem:[#allocation4 + $0x28] sm:$0xff] %v1802
        %1835 = vst [vmem:[#allocation4 + $0x30] sm:$0xff] %v1803
        %1836 = vst [vmem:[#allocation4 + $0x38] sm:$0xff] %v1804
        %1837 = vst [vmem:[#allocation4 + $0x40] sm:$0xff] %v1805
        %1838 = vst [vmem:[#allocation4 + $0x48] sm:$0xff] %v1806
        %1839 = vst [vmem:[#allocation4 + $0x50] sm:$0xff] %v1807
        %1840 = vst [vmem:[#allocation4 + $0x58] sm:$0xff] %v1808
        %1841 = vst [vmem:[#allocation4 + $0x60] sm:$0xff] %v1809
        %1842 = vst [vmem:[#allocation4 + $0x68] sm:$0xff] %v1810
        %1843 = vst [vmem:[#allocation4 + $0x70] sm:$0xff] %v1811
        %1844 = vst [vmem:[#allocation4 + $0x78] sm:$0xff] %v1812
        %1845 = vst [vmem:[#allocation4 + $0x80] sm:$0xff] %v1813
        %1846 = vst [vmem:[#allocation4 + $0x88] sm:$0xff] %v1814
        %1847 = vst [vmem:[#allocation4 + $0x90] sm:$0xff] %v1815
        %1848 = vst [vmem:[#allocation4 + $0x98] sm:$0xff] %v1816
        %1849 = vst [vmem:[#allocation4 + $0xa0] sm:$0xff] %v1817
        %1850 = vst [vmem:[#allocation4 + $0xa8] sm:$0xff] %v1818
        %1851 = vst [vmem:[#allocation4 + $0xb0] sm:$0xff] %v1819
        %1852 = vst [vmem:[#allocation4 + $0xb8] sm:$0xff] %v1820
        %1853 = vst [vmem:[#allocation4 + $0xc0] sm:$0xff] %v1821
        %1854 = vst [vmem:[#allocation4 + $0xc8] sm:$0xff] %v1822
        %1855 = vst [vmem:[#allocation4 + $0xd0] sm:$0xff] %v1823
        %1856 = vst [vmem:[#allocation4 + $0xd8] sm:$0xff] %v1824
        %1857 = vst [vmem:[#allocation4 + $0xe0] sm:$0xff] %v1825
        %1858 = vst [vmem:[#allocation4 + $0xe8] sm:$0xff] %v1826
        %1859 = vst [vmem:[#allocation4 + $0xf0] sm:$0xff] %v1827
        %1860 = vst [vmem:[#allocation4 + $0xf8] sm:$0xff] %v1828
        %p1861 = scmp.eq.s32.totalorder %s46, 1
        // Predicated region
        $region85: #{tpu_custom_call.1} parent=55 // pred_check
          %p1862 = pneg %p1861
        $region86: #{tpu_custom_call.1} parent=55 // pred_check_branch
          %1864 = sbr.rel (%p1862) target = $region88
        $region87: #{tpu_custom_call.1} parent=55 // pred_region
          %v1865 = vld [vmem:[#allocation2] sm:$0xff]
          %v1866 = vld [vmem:[#allocation2 + $0x8] sm:$0xff]
          %v1867 = vld [vmem:[#allocation2 + $0x10] sm:$0xff]
          %v1868 = vld [vmem:[#allocation2 + $0x18] sm:$0xff]
          %v1869 = vld [vmem:[#allocation2 + $0x20] sm:$0xff]
          %v1870 = vld [vmem:[#allocation2 + $0x28] sm:$0xff]
          %v1871 = vld [vmem:[#allocation2 + $0x30] sm:$0xff]
          %v1872 = vld [vmem:[#allocation2 + $0x38] sm:$0xff]
          %v1873 = vld [vmem:[#allocation2 + $0x40] sm:$0xff]
          %v1874 = vld [vmem:[#allocation2 + $0x48] sm:$0xff]
          %v1875 = vld [vmem:[#allocation2 + $0x50] sm:$0xff]
          %v1876 = vld [vmem:[#allocation2 + $0x58] sm:$0xff]
          %v1877 = vld [vmem:[#allocation2 + $0x60] sm:$0xff]
          %v1878 = vld [vmem:[#allocation2 + $0x68] sm:$0xff]
          %v1879 = vld [vmem:[#allocation2 + $0x70] sm:$0xff]
          %v1880 = vld [vmem:[#allocation2 + $0x78] sm:$0xff]
          %v1881 = vld [vmem:[#allocation2 + $0x80] sm:$0xff]
          %v1882 = vld [vmem:[#allocation2 + $0x88] sm:$0xff]
          %v1883 = vld [vmem:[#allocation2 + $0x90] sm:$0xff]
          %v1884 = vld [vmem:[#allocation2 + $0x98] sm:$0xff]
          %v1885 = vld [vmem:[#allocation2 + $0xa0] sm:$0xff]
          %v1886 = vld [vmem:[#allocation2 + $0xa8] sm:$0xff]
          %v1887 = vld [vmem:[#allocation2 + $0xb0] sm:$0xff]
          %v1888 = vld [vmem:[#allocation2 + $0xb8] sm:$0xff]
          %v1889 = vld [vmem:[#allocation2 + $0xc0] sm:$0xff]
          %v1890 = vld [vmem:[#allocation2 + $0xc8] sm:$0xff]
          %v1891 = vld [vmem:[#allocation2 + $0xd0] sm:$0xff]
          %v1892 = vld [vmem:[#allocation2 + $0xd8] sm:$0xff]
          %v1893 = vld [vmem:[#allocation2 + $0xe0] sm:$0xff]
          %v1894 = vld [vmem:[#allocation2 + $0xe8] sm:$0xff]
          %v1895 = vld [vmem:[#allocation2 + $0xf0] sm:$0xff]
          %v1896 = vld [vmem:[#allocation2 + $0xf8] sm:$0xff]
          %v1897 = vld [vmem:[%s6] sm:$0x3]
          %v1899 = vlaneseq
          %v1900 = vshrl.u32 %v1899, 7
          %v1901 = vsub.s32 0, %v1900
          %v1902 = vrot.slane %v1897, %v1901
          %v1903 = vlaneseq
          %v1904 = vshrl.u32 %v1903, 7
          %v1905 = vsub.s32 1, %v1904
          %v1906 = vrot.slane %v1897, %v1905
          %v1909 = vadd.f32 %v1865, %v1902
          %v1910 = vadd.f32 %v1866, %v1906
          %v1911 = vadd.f32 %v1867, %v1902
          %v1912 = vadd.f32 %v1868, %v1906
          %v1913 = vadd.f32 %v1869, %v1902
          %v1914 = vadd.f32 %v1870, %v1906
          %v1915 = vadd.f32 %v1871, %v1902
          %v1916 = vadd.f32 %v1872, %v1906
          %v1917 = vadd.f32 %v1873, %v1902
          %v1918 = vadd.f32 %v1874, %v1906
          %v1919 = vadd.f32 %v1875, %v1902
          %v1920 = vadd.f32 %v1876, %v1906
          %v1921 = vadd.f32 %v1877, %v1902
          %v1922 = vadd.f32 %v1878, %v1906
          %v1923 = vadd.f32 %v1879, %v1902
          %v1924 = vadd.f32 %v1880, %v1906
          %v1925 = vadd.f32 %v1881, %v1902
          %v1926 = vadd.f32 %v1882, %v1906
          %v1927 = vadd.f32 %v1883, %v1902
          %v1928 = vadd.f32 %v1884, %v1906
          %v1929 = vadd.f32 %v1885, %v1902
          %v1930 = vadd.f32 %v1886, %v1906
          %v1931 = vadd.f32 %v1887, %v1902
          %v1932 = vadd.f32 %v1888, %v1906
          %v1933 = vadd.f32 %v1889, %v1902
          %v1934 = vadd.f32 %v1890, %v1906
          %v1935 = vadd.f32 %v1891, %v1902
          %v1936 = vadd.f32 %v1892, %v1906
          %v1937 = vadd.f32 %v1893, %v1902
          %v1938 = vadd.f32 %v1894, %v1906
          %v1939 = vadd.f32 %v1895, %v1902
          %v1940 = vadd.f32 %v1896, %v1906
          %1941 = vst [vmem:[%s629] sm:$0xff] %v1909
          %1942 = vst [vmem:[%s629 + $0x8] sm:$0xff] %v1910
          %1943 = vst [vmem:[%s629 + $0x10] sm:$0xff] %v1911
          %1944 = vst [vmem:[%s629 + $0x18] sm:$0xff] %v1912
          %1945 = vst [vmem:[%s629 + $0x20] sm:$0xff] %v1913
          %1946 = vst [vmem:[%s629 + $0x28] sm:$0xff] %v1914
          %1947 = vst [vmem:[%s629 + $0x30] sm:$0xff] %v1915
          %1948 = vst [vmem:[%s629 + $0x38] sm:$0xff] %v1916
          %1949 = vst [vmem:[%s629 + $0x40] sm:$0xff] %v1917
          %1950 = vst [vmem:[%s629 + $0x48] sm:$0xff] %v1918
          %1951 = vst [vmem:[%s629 + $0x50] sm:$0xff] %v1919
          %1952 = vst [vmem:[%s629 + $0x58] sm:$0xff] %v1920
          %1953 = vst [vmem:[%s629 + $0x60] sm:$0xff] %v1921
          %1954 = vst [vmem:[%s629 + $0x68] sm:$0xff] %v1922
          %1955 = vst [vmem:[%s629 + $0x70] sm:$0xff] %v1923
          %1956 = vst [vmem:[%s629 + $0x78] sm:$0xff] %v1924
          %1957 = vst [vmem:[%s629 + $0x80] sm:$0xff] %v1925
          %1958 = vst [vmem:[%s629 + $0x88] sm:$0xff] %v1926
          %1959 = vst [vmem:[%s629 + $0x90] sm:$0xff] %v1927
          %1960 = vst [vmem:[%s629 + $0x98] sm:$0xff] %v1928
          %1961 = vst [vmem:[%s629 + $0xa0] sm:$0xff] %v1929
          %1962 = vst [vmem:[%s629 + $0xa8] sm:$0xff] %v1930
          %1963 = vst [vmem:[%s629 + $0xb0] sm:$0xff] %v1931
          %1964 = vst [vmem:[%s629 + $0xb8] sm:$0xff] %v1932
          %1965 = vst [vmem:[%s629 + $0xc0] sm:$0xff] %v1933
          %1966 = vst [vmem:[%s629 + $0xc8] sm:$0xff] %v1934
          %1967 = vst [vmem:[%s629 + $0xd0] sm:$0xff] %v1935
          %1968 = vst [vmem:[%s629 + $0xd8] sm:$0xff] %v1936
          %1969 = vst [vmem:[%s629 + $0xe0] sm:$0xff] %v1937
          %1970 = vst [vmem:[%s629 + $0xe8] sm:$0xff] %v1938
          %1971 = vst [vmem:[%s629 + $0xf0] sm:$0xff] %v1939
          %1972 = vst [vmem:[%s629 + $0xf8] sm:$0xff] %v1940
          %v1973 = vld [vmem:[#allocation3] sm:$0xff]
          %v1974 = vld [vmem:[#allocation3 + $0x8] sm:$0xff]
          %v1975 = vld [vmem:[#allocation3 + $0x10] sm:$0xff]
          %v1976 = vld [vmem:[#allocation3 + $0x18] sm:$0xff]
          %v1977 = vld [vmem:[#allocation3 + $0x20] sm:$0xff]
          %v1978 = vld [vmem:[#allocation3 + $0x28] sm:$0xff]
          %v1979 = vld [vmem:[#allocation3 + $0x30] sm:$0xff]
          %v1980 = vld [vmem:[#allocation3 + $0x38] sm:$0xff]
          %v1981 = vld [vmem:[#allocation3 + $0x40] sm:$0xff]
          %v1982 = vld [vmem:[#allocation3 + $0x48] sm:$0xff]
          %v1983 = vld [vmem:[#allocation3 + $0x50] sm:$0xff]
          %v1984 = vld [vmem:[#allocation3 + $0x58] sm:$0xff]
          %v1985 = vld [vmem:[#allocation3 + $0x60] sm:$0xff]
          %v1986 = vld [vmem:[#allocation3 + $0x68] sm:$0xff]
          %v1987 = vld [vmem:[#allocation3 + $0x70] sm:$0xff]
          %v1988 = vld [vmem:[#allocation3 + $0x78] sm:$0xff]
          %v1989 = vld [vmem:[#allocation3 + $0x80] sm:$0xff]
          %v1990 = vld [vmem:[#allocation3 + $0x88] sm:$0xff]
          %v1991 = vld [vmem:[#allocation3 + $0x90] sm:$0xff]
          %v1992 = vld [vmem:[#allocation3 + $0x98] sm:$0xff]
          %v1993 = vld [vmem:[#allocation3 + $0xa0] sm:$0xff]
          %v1994 = vld [vmem:[#allocation3 + $0xa8] sm:$0xff]
          %v1995 = vld [vmem:[#allocation3 + $0xb0] sm:$0xff]
          %v1996 = vld [vmem:[#allocation3 + $0xb8] sm:$0xff]
          %v1997 = vld [vmem:[#allocation3 + $0xc0] sm:$0xff]
          %v1998 = vld [vmem:[#allocation3 + $0xc8] sm:$0xff]
          %v1999 = vld [vmem:[#allocation3 + $0xd0] sm:$0xff]
          %v2000 = vld [vmem:[#allocation3 + $0xd8] sm:$0xff]
          %v2001 = vld [vmem:[#allocation3 + $0xe0] sm:$0xff]
          %v2002 = vld [vmem:[#allocation3 + $0xe8] sm:$0xff]
          %v2003 = vld [vmem:[#allocation3 + $0xf0] sm:$0xff]
          %v2004 = vld [vmem:[#allocation3 + $0xf8] sm:$0xff]
          %v2005 = vld [vmem:[%s7] sm:$0x3]
          %v2007 = vlaneseq
          %v2008 = vshrl.u32 %v2007, 7
          %v2009 = vsub.s32 0, %v2008
          %v2010 = vrot.slane %v2005, %v2009
          %v2011 = vlaneseq
          %v2012 = vshrl.u32 %v2011, 7
          %v2013 = vsub.s32 1, %v2012
          %v2014 = vrot.slane %v2005, %v2013
          %v2017 = vadd.f32 %v1973, %v2010
          %v2018 = vadd.f32 %v1974, %v2014
          %v2019 = vadd.f32 %v1975, %v2010
          %v2020 = vadd.f32 %v1976, %v2014
          %v2021 = vadd.f32 %v1977, %v2010
          %v2022 = vadd.f32 %v1978, %v2014
          %v2023 = vadd.f32 %v1979, %v2010
          %v2024 = vadd.f32 %v1980, %v2014
          %v2025 = vadd.f32 %v1981, %v2010
          %v2026 = vadd.f32 %v1982, %v2014
          %v2027 = vadd.f32 %v1983, %v2010
          %v2028 = vadd.f32 %v1984, %v2014
          %v2029 = vadd.f32 %v1985, %v2010
          %v2030 = vadd.f32 %v1986, %v2014
          %v2031 = vadd.f32 %v1987, %v2010
          %v2032 = vadd.f32 %v1988, %v2014
          %v2033 = vadd.f32 %v1989, %v2010
          %v2034 = vadd.f32 %v1990, %v2014
          %v2035 = vadd.f32 %v1991, %v2010
          %v2036 = vadd.f32 %v1992, %v2014
          %v2037 = vadd.f32 %v1993, %v2010
          %v2038 = vadd.f32 %v1994, %v2014
          %v2039 = vadd.f32 %v1995, %v2010
          %v2040 = vadd.f32 %v1996, %v2014
          %v2041 = vadd.f32 %v1997, %v2010
          %v2042 = vadd.f32 %v1998, %v2014
          %v2043 = vadd.f32 %v1999, %v2010
          %v2044 = vadd.f32 %v2000, %v2014
          %v2045 = vadd.f32 %v2001, %v2010
          %v2046 = vadd.f32 %v2002, %v2014
          %v2047 = vadd.f32 %v2003, %v2010
          %v2048 = vadd.f32 %v2004, %v2014
          %2049 = vst [vmem:[%s636] sm:$0xff] %v2017
          %2050 = vst [vmem:[%s636 + $0x8] sm:$0xff] %v2018
          %2051 = vst [vmem:[%s636 + $0x10] sm:$0xff] %v2019
          %2052 = vst [vmem:[%s636 + $0x18] sm:$0xff] %v2020
          %2053 = vst [vmem:[%s636 + $0x20] sm:$0xff] %v2021
          %2054 = vst [vmem:[%s636 + $0x28] sm:$0xff] %v2022
          %2055 = vst [vmem:[%s636 + $0x30] sm:$0xff] %v2023
          %2056 = vst [vmem:[%s636 + $0x38] sm:$0xff] %v2024
          %2057 = vst [vmem:[%s636 + $0x40] sm:$0xff] %v2025
          %2058 = vst [vmem:[%s636 + $0x48] sm:$0xff] %v2026
          %2059 = vst [vmem:[%s636 + $0x50] sm:$0xff] %v2027
          %2060 = vst [vmem:[%s636 + $0x58] sm:$0xff] %v2028
          %2061 = vst [vmem:[%s636 + $0x60] sm:$0xff] %v2029
          %2062 = vst [vmem:[%s636 + $0x68] sm:$0xff] %v2030
          %2063 = vst [vmem:[%s636 + $0x70] sm:$0xff] %v2031
          %2064 = vst [vmem:[%s636 + $0x78] sm:$0xff] %v2032
          %2065 = vst [vmem:[%s636 + $0x80] sm:$0xff] %v2033
          %2066 = vst [vmem:[%s636 + $0x88] sm:$0xff] %v2034
          %2067 = vst [vmem:[%s636 + $0x90] sm:$0xff] %v2035
          %2068 = vst [vmem:[%s636 + $0x98] sm:$0xff] %v2036
          %2069 = vst [vmem:[%s636 + $0xa0] sm:$0xff] %v2037
          %2070 = vst [vmem:[%s636 + $0xa8] sm:$0xff] %v2038
          %2071 = vst [vmem:[%s636 + $0xb0] sm:$0xff] %v2039
          %2072 = vst [vmem:[%s636 + $0xb8] sm:$0xff] %v2040
          %2073 = vst [vmem:[%s636 + $0xc0] sm:$0xff] %v2041
          %2074 = vst [vmem:[%s636 + $0xc8] sm:$0xff] %v2042
          %2075 = vst [vmem:[%s636 + $0xd0] sm:$0xff] %v2043
          %2076 = vst [vmem:[%s636 + $0xd8] sm:$0xff] %v2044
          %2077 = vst [vmem:[%s636 + $0xe0] sm:$0xff] %v2045
          %2078 = vst [vmem:[%s636 + $0xe8] sm:$0xff] %v2046
          %2079 = vst [vmem:[%s636 + $0xf0] sm:$0xff] %v2047
          %2080 = vst [vmem:[%s636 + $0xf8] sm:$0xff] %v2048
          %v2081 = vld [vmem:[#allocation4] sm:$0xff]
          %v2082 = vld [vmem:[#allocation4 + $0x8] sm:$0xff]
          %v2083 = vld [vmem:[#allocation4 + $0x10] sm:$0xff]
          %v2084 = vld [vmem:[#allocation4 + $0x18] sm:$0xff]
          %v2085 = vld [vmem:[#allocation4 + $0x20] sm:$0xff]
          %v2086 = vld [vmem:[#allocation4 + $0x28] sm:$0xff]
          %v2087 = vld [vmem:[#allocation4 + $0x30] sm:$0xff]
          %v2088 = vld [vmem:[#allocation4 + $0x38] sm:$0xff]
          %v2089 = vld [vmem:[#allocation4 + $0x40] sm:$0xff]
          %v2090 = vld [vmem:[#allocation4 + $0x48] sm:$0xff]
          %v2091 = vld [vmem:[#allocation4 + $0x50] sm:$0xff]
          %v2092 = vld [vmem:[#allocation4 + $0x58] sm:$0xff]
          %v2093 = vld [vmem:[#allocation4 + $0x60] sm:$0xff]
          %v2094 = vld [vmem:[#allocation4 + $0x68] sm:$0xff]
          %v2095 = vld [vmem:[#allocation4 + $0x70] sm:$0xff]
          %v2096 = vld [vmem:[#allocation4 + $0x78] sm:$0xff]
          %v2097 = vld [vmem:[#allocation4 + $0x80] sm:$0xff]
          %v2098 = vld [vmem:[#allocation4 + $0x88] sm:$0xff]
          %v2099 = vld [vmem:[#allocation4 + $0x90] sm:$0xff]
          %v2100 = vld [vmem:[#allocation4 + $0x98] sm:$0xff]
          %v2101 = vld [vmem:[#allocation4 + $0xa0] sm:$0xff]
          %v2102 = vld [vmem:[#allocation4 + $0xa8] sm:$0xff]
          %v2103 = vld [vmem:[#allocation4 + $0xb0] sm:$0xff]
          %v2104 = vld [vmem:[#allocation4 + $0xb8] sm:$0xff]
          %v2105 = vld [vmem:[#allocation4 + $0xc0] sm:$0xff]
          %v2106 = vld [vmem:[#allocation4 + $0xc8] sm:$0xff]
          %v2107 = vld [vmem:[#allocation4 + $0xd0] sm:$0xff]
          %v2108 = vld [vmem:[#allocation4 + $0xd8] sm:$0xff]
          %v2109 = vld [vmem:[#allocation4 + $0xe0] sm:$0xff]
          %v2110 = vld [vmem:[#allocation4 + $0xe8] sm:$0xff]
          %v2111 = vld [vmem:[#allocation4 + $0xf0] sm:$0xff]
          %v2112 = vld [vmem:[#allocation4 + $0xf8] sm:$0xff]
          %v2113 = vld [vmem:[%s8] sm:$0x3]
          %v2115 = vlaneseq
          %v2116 = vshrl.u32 %v2115, 7
          %v2117 = vsub.s32 0, %v2116
          %v2118 = vrot.slane %v2113, %v2117
          %v2119 = vlaneseq
          %v2120 = vshrl.u32 %v2119, 7
          %v2121 = vsub.s32 1, %v2120
          %v2122 = vrot.slane %v2113, %v2121
          %v2125 = vadd.f32 %v2081, %v2118
          %v2126 = vadd.f32 %v2082, %v2122
          %v2127 = vadd.f32 %v2083, %v2118
          %v2128 = vadd.f32 %v2084, %v2122
          %v2129 = vadd.f32 %v2085, %v2118
          %v2130 = vadd.f32 %v2086, %v2122
          %v2131 = vadd.f32 %v2087, %v2118
          %v2132 = vadd.f32 %v2088, %v2122
          %v2133 = vadd.f32 %v2089, %v2118
          %v2134 = vadd.f32 %v2090, %v2122
          %v2135 = vadd.f32 %v2091, %v2118
          %v2136 = vadd.f32 %v2092, %v2122
          %v2137 = vadd.f32 %v2093, %v2118
          %v2138 = vadd.f32 %v2094, %v2122
          %v2139 = vadd.f32 %v2095, %v2118
          %v2140 = vadd.f32 %v2096, %v2122
          %v2141 = vadd.f32 %v2097, %v2118
          %v2142 = vadd.f32 %v2098, %v2122
          %v2143 = vadd.f32 %v2099, %v2118
          %v2144 = vadd.f32 %v2100, %v2122
          %v2145 = vadd.f32 %v2101, %v2118
          %v2146 = vadd.f32 %v2102, %v2122
          %v2147 = vadd.f32 %v2103, %v2118
          %v2148 = vadd.f32 %v2104, %v2122
          %v2149 = vadd.f32 %v2105, %v2118
          %v2150 = vadd.f32 %v2106, %v2122
          %v2151 = vadd.f32 %v2107, %v2118
          %v2152 = vadd.f32 %v2108, %v2122
          %v2153 = vadd.f32 %v2109, %v2118
          %v2154 = vadd.f32 %v2110, %v2122
          %v2155 = vadd.f32 %v2111, %v2118
          %v2156 = vadd.f32 %v2112, %v2122
          %2157 = vst [vmem:[%s643] sm:$0xff] %v2125
          %2158 = vst [vmem:[%s643 + $0x8] sm:$0xff] %v2126
          %2159 = vst [vmem:[%s643 + $0x10] sm:$0xff] %v2127
          %2160 = vst [vmem:[%s643 + $0x18] sm:$0xff] %v2128
          %2161 = vst [vmem:[%s643 + $0x20] sm:$0xff] %v2129
          %2162 = vst [vmem:[%s643 + $0x28] sm:$0xff] %v2130
          %2163 = vst [vmem:[%s643 + $0x30] sm:$0xff] %v2131
          %2164 = vst [vmem:[%s643 + $0x38] sm:$0xff] %v2132
          %2165 = vst [vmem:[%s643 + $0x40] sm:$0xff] %v2133
          %2166 = vst [vmem:[%s643 + $0x48] sm:$0xff] %v2134
          %2167 = vst [vmem:[%s643 + $0x50] sm:$0xff] %v2135
          %2168 = vst [vmem:[%s643 + $0x58] sm:$0xff] %v2136
          %2169 = vst [vmem:[%s643 + $0x60] sm:$0xff] %v2137
          %2170 = vst [vmem:[%s643 + $0x68] sm:$0xff] %v2138
          %2171 = vst [vmem:[%s643 + $0x70] sm:$0xff] %v2139
          %2172 = vst [vmem:[%s643 + $0x78] sm:$0xff] %v2140
          %2173 = vst [vmem:[%s643 + $0x80] sm:$0xff] %v2141
          %2174 = vst [vmem:[%s643 + $0x88] sm:$0xff] %v2142
          %2175 = vst [vmem:[%s643 + $0x90] sm:$0xff] %v2143
          %2176 = vst [vmem:[%s643 + $0x98] sm:$0xff] %v2144
          %2177 = vst [vmem:[%s643 + $0xa0] sm:$0xff] %v2145
          %2178 = vst [vmem:[%s643 + $0xa8] sm:$0xff] %v2146
          %2179 = vst [vmem:[%s643 + $0xb0] sm:$0xff] %v2147
          %2180 = vst [vmem:[%s643 + $0xb8] sm:$0xff] %v2148
          %2181 = vst [vmem:[%s643 + $0xc0] sm:$0xff] %v2149
          %2182 = vst [vmem:[%s643 + $0xc8] sm:$0xff] %v2150
          %2183 = vst [vmem:[%s643 + $0xd0] sm:$0xff] %v2151
          %2184 = vst [vmem:[%s643 + $0xd8] sm:$0xff] %v2152
          %2185 = vst [vmem:[%s643 + $0xe0] sm:$0xff] %v2153
          %2186 = vst [vmem:[%s643 + $0xe8] sm:$0xff] %v2154
          %2187 = vst [vmem:[%s643 + $0xf0] sm:$0xff] %v2155
          %2188 = vst [vmem:[%s643 + $0xf8] sm:$0xff] %v2156
        $region88: #{tpu_custom_call.1} parent=55 // pred_fallthru
          _
        %s2189 = sand.u32 %s286, 1
        %s2190 = scalar_lea.sflag [#allocation7], %s2189
        %s2191 = sand.u32 %s286, 1
        %s2192 = smul.addr %s2191, 256
        %s2193 = scalar_lea.vmem [#allocation16], %s2192
        %s2194 = sand.u32 %s41, 1
        %s2195 = scalar_lea.sflag [#allocation18], %s2194
        %s2196 = sand.u32 %s312, 1
        %s2197 = smul.addr %s2196, 256
        %s2198 = scalar_lea.vmem [#allocation17], %s2197
        %s2199 = sand.u32 %s41, 1
        %s2200 = scalar_lea.sflag [#allocation18], %s2199
        %s2201 = sand.u32 %s338, 1
        %s2202 = smul.addr %s2201, 256
        %s2203 = scalar_lea.vmem [#allocation19], %s2202
        // Predicated region
        $region89: #{tpu_custom_call.1} parent=55 // pred_check
          %p2204 = pneg %p296
        $region90: #{tpu_custom_call.1} parent=55 // pred_check_branch
          %2206 = sbr.rel (%p2204) target = $region92
        $region91: #{tpu_custom_call.1} parent=55 // pred_region
          %s2207 = smul.u32 16, %s45
          %s2209 = ssub.s32 4096, 4096
          %2210 = vsyncadd %s2190, %s2209
          %s2211 = smul.addr %s2207, 2
          %s2212 = smul.addr %s2211, 128
          %s2213 = scalar_lea.hbm %s9, %s2212
          %s2214 = sshll.u32 %s2193, 4
          %s2215 = int_to_ptr.vmem [resolvable:$true] %s2214
          %2220 = dma.vmem_to_hbm [thread:$0]  %s2215, 4096, %s2213, %s2190, 256, 256, 16
        $region92: #{tpu_custom_call.1} parent=55 // pred_fallthru
          _
        // Predicated region
        $region93: #{tpu_custom_call.1} parent=55 // pred_check
          %p2221 = pneg %p322
        $region94: #{tpu_custom_call.1} parent=55 // pred_check_branch
          %2223 = sbr.rel (%p2221) target = $region96
        $region95: #{tpu_custom_call.1} parent=55 // pred_region
          %s2224 = smul.u32 16, %s45
          %s2226 = ssub.s32 4096, 4096
          %2227 = vsyncadd %s2195, %s2226
          %s2228 = smul.addr %s2224, 2
          %s2229 = smul.addr %s2228, 128
          %s2230 = scalar_lea.hbm %s10, %s2229
          %s2231 = sshll.u32 %s2198, 4
          %s2232 = int_to_ptr.vmem [resolvable:$true] %s2231
          %2237 = dma.vmem_to_hbm [thread:$0]  %s2232, 4096, %s2230, %s2195, 256, 256, 16
        $region96: #{tpu_custom_call.1} parent=55 // pred_fallthru
          _
        // Predicated region
        $region97: #{tpu_custom_call.1} parent=55 // pred_check
          %p2238 = pneg %p348
        $region98: #{tpu_custom_call.1} parent=55 // pred_check_branch
          %2240 = sbr.rel (%p2238) target = $region100
        $region99: #{tpu_custom_call.1} parent=55 // pred_region
          %s2241 = smul.u32 16, %s45
          %s2243 = ssub.s32 4096, 4096
          %2244 = vsyncadd %s2200, %s2243
          %s2245 = smul.addr %s2241, 2
          %s2246 = smul.addr %s2245, 128
          %s2247 = scalar_lea.hbm %s11, %s2246
          %s2248 = sshll.u32 %s2203, 4
          %s2249 = int_to_ptr.vmem [resolvable:$true] %s2248
          %2254 = dma.vmem_to_hbm [thread:$0]  %s2249, 4096, %s2247, %s2200, 256, 256, 16
        $region100: #{tpu_custom_call.1} parent=55 // pred_fallthru
          _
      $region56: #{tpu_custom_call.1} parent=5 // pred_fallthru
        _
      %p2255 = scmp.le.s32.totalorder 2, %s36
      // Predicated region
      $region101: #{tpu_custom_call.1} parent=5 // pred_check
        %p2256 = pneg %p2255
      $region102: #{tpu_custom_call.1} parent=5 // pred_check_branch
        %2258 = sbr.rel (%p2256) target = $region104
      $region103: #{tpu_custom_call.1} parent=5 // pred_region
        %s2259 = ssub.s32 %s36, 2
        // Predicated region
        $region105: #{tpu_custom_call.1} parent=103 // pred_check
          %p2260 = pneg %p302
        $region106: #{tpu_custom_call.1} parent=103 // pred_check_branch
          %2262 = sbr.rel (%p2260) target = $region108
        $region107: #{tpu_custom_call.1} parent=103 // pred_region
          %s2263 = sand.u32 %s287, 1
          %s2264 = scalar_lea.sflag [#allocation7], %s2263
          %s2265 = sand.u32 %s287, 1
          %s2266 = smul.addr %s2265, 256
          %s2267 = scalar_lea.vmem [#allocation16], %s2266
          %2268 = dma.done %s2264, 4096
        $region108: #{tpu_custom_call.1} parent=103 // pred_fallthru
          _
        // Predicated region
        $region109: #{tpu_custom_call.1} parent=103 // pred_check
          %p2269 = pneg %p328
        $region110: #{tpu_custom_call.1} parent=103 // pred_check_branch
          %2271 = sbr.rel (%p2269) target = $region112
        $region111: #{tpu_custom_call.1} parent=103 // pred_region
          %s2272 = sand.u32 %s42, 1
          %s2273 = scalar_lea.sflag [#allocation18], %s2272
          %s2274 = sand.u32 %s313, 1
          %s2275 = smul.addr %s2274, 256
          %s2276 = scalar_lea.vmem [#allocation17], %s2275
          %2277 = dma.done %s2273, 4096
        $region112: #{tpu_custom_call.1} parent=103 // pred_fallthru
          _
        // Predicated region
        $region113: #{tpu_custom_call.1} parent=103 // pred_check
          %p2278 = pneg %p354
        $region114: #{tpu_custom_call.1} parent=103 // pred_check_branch
          %2280 = sbr.rel (%p2278) target = $region116
        $region115: #{tpu_custom_call.1} parent=103 // pred_region
          %s2281 = sand.u32 %s42, 1
          %s2282 = scalar_lea.sflag [#allocation18], %s2281
          %s2283 = sand.u32 %s339, 1
          %s2284 = smul.addr %s2283, 256
          %s2285 = scalar_lea.vmem [#allocation19], %s2284
          %2286 = dma.done %s2282, 4096
        $region116: #{tpu_custom_call.1} parent=103 // pred_fallthru
          _
      $region104: #{tpu_custom_call.1} parent=5 // pred_fallthru
        _
    $region6: #{tpu_custom_call.1} parent=1 // loop_footer
      %s40 = sadd.s32 1, %s36
    $region7: #{tpu_custom_call.1} parent=1 // loop_footer_branch
      %35 = sbr.rel target = $region3
    $region8: #{tpu_custom_call.1} parent=1 // loop_exit
      _
    %2287 = vsyncpa [#allocation6], 1
    %s2288 = scalar_lea.sflag [#allocation6], 1
    %2289 = vsyncpa %s2288, 1
    %2290 = vsyncpa [#allocation9], 1
    %s2291 = scalar_lea.sflag [#allocation9], 1
    %2292 = vsyncpa %s2291, 1
    %2293 = vsyncpa [#allocation12], 1
    %s2294 = scalar_lea.sflag [#allocation12], 1
    %2295 = vsyncpa %s2294, 1
    %2296 = vsyncpa [#allocation15], 1
    %s2297 = scalar_lea.sflag [#allocation15], 1
    %2298 = vsyncpa %s2297, 1
    %2299 = vsyncpa [#allocation7], 1
    %s2300 = scalar_lea.sflag [#allocation7], 1
    %2301 = vsyncpa %s2300, 1
    %2302 = vsyncpa [#allocation18], 1
    %s2303 = scalar_lea.sflag [#allocation18], 1
    %2304 = vsyncpa %s2303, 1

</llo_original>
